<compile_context>
chip_gen: v5e
topology: v5e:2x2
jax: 0.10.0
libtpu: 0.0.40
codegen_flags: <defaults>
</compile_context>

<pallas_src>
import math

import jax
import jax.numpy as jnp
from jax.experimental import pallas as pl
from jax.experimental.pallas import tpu as pltpu

# ---- synthetic small config ----
B, S, H = 2, 8, 32           # batch, seq, hidden_size
NH, D = 4, 8                 # num_attention_heads, attention_head_size (NH*D == H)
I = 256                      # intermediate_size (multiple of 128 so streamed tiles are lane-aligned)
TI = 128                     # intermediate tile streamed per grid step
                             # (production budgets: ~512 on v7x (64 MiB VMEM), ~1024 on v5e/v6e)
EPS = 1e-5                   # layer_norm_eps
SCALING = 1.0 / math.sqrt(D)

assert NH * D == H and I % TI == 0


def _atm_layer_norm(h, w, b):
    # AlexaTMLayerNorm: "variance" is E[x^2] (uncentered), exactly as in the module.
    var = jnp.mean(h * h, axis=-1, keepdims=True)
    mean = jnp.mean(h, axis=-1, keepdims=True)
    h = (h - mean) * jax.lax.rsqrt(var + EPS)
    return h * w + b


def _gelu_new(x):
    # ACT2FN["gelu_new"] (tanh approximation)
    c = 0.7978845608028654  # sqrt(2/pi)
    return 0.5 * x * (1.0 + jnp.tanh(c * (x + 0.044715 * x * x * x)))


def alexatm_layer_kernel(x_ref, wqkv_ref, wo_ref, wi_ref, wout_ref,
                         vecs_ref, bqkv_ref, bi_ref, out_ref,
                         attn_ref, ln2_ref, acc_ref):
    k = pl.program_id(0)

    # ---- phase 1 (k == 0 only): LN1 -> fused QKV -> attention -> output proj -> LN2 ----
    @pl.when(k == 0)
    def _():
        x = x_ref[...]                                   # (B*S, H) f32 == before_layer_norm
        vecs = vecs_ref[...]                             # (6, H) f32 parameter slab
        ln1_w, ln1_b = vecs[0:1, :], vecs[1:2, :]
        ln2_w, ln2_b = vecs[2:3, :], vecs[3:4, :]
        bo = vecs[4:5, :]

        hs = _atm_layer_norm(x, ln1_w, ln1_b)

        # Fused Q/K/V projection (bf16 MXU, f32 accumulate).  The 1/sqrt(D) attention
        # scale is folded into the Q weight/bias at parameter-prep time.
        qkv = jnp.dot(hs.astype(jnp.bfloat16), wqkv_ref[...],
                      preferred_element_type=jnp.float32) + bqkv_ref[...]   # (B*S, 3H) f32
        q, kk, v = qkv[:, :H], qkv[:, H:2 * H], qkv[:, 2 * H:]

        # Stack heads along a leading batch axis -> (NH*B, S, D), bf16 MXU operands.
        # TODO(synk): at production NH=32 / D=128 replace this Python concat with a head
        # grid axis (flash-style) instead of NH sub-128 lane slices.
        def heads(t):
            return jnp.concatenate(
                [t[:, h * D:(h + 1) * D].reshape(B, S, D) for h in range(NH)],
                axis=0).astype(jnp.bfloat16)

        qh, kh, vh = heads(q), heads(kk), heads(v)

        # Batched attention: one score einsum, ONE softmax pass, one ctx einsum.
        scores = jnp.einsum('bqd,bkd->bqk', qh, kh,
                            preferred_element_type=jnp.float32)             # (NH*B, S, S) f32
        scores = scores - jnp.max(scores, axis=-1, keepdims=True)
        p = jnp.exp(scores)
        p = p * pl.reciprocal(jnp.sum(p, axis=-1, keepdims=True), approx=True)
        ctx = jnp.einsum('bqk,bkd->bqd', p.astype(jnp.bfloat16), vh,
                         preferred_element_type=jnp.float32)                # (NH*B, S, D) f32
        # TODO(synk): at production S, block this over KV tiles (online softmax) instead of
        # materializing the full (NH*B, S, S) score matrix.

        # Re-merge heads onto the lane axis; single bf16 output-projection matmul.
        ctx2 = jnp.concatenate(
            [ctx[h * B:(h + 1) * B].reshape(B * S, D) for h in range(NH)], axis=-1)
        attn_out = jnp.dot(ctx2.astype(jnp.bfloat16), wo_ref[...],
                           preferred_element_type=jnp.float32) + bo + x     # + before_layer_norm

        attn_ref[...] = attn_out
        ln2_ref[...] = _atm_layer_norm(attn_out, ln2_w, ln2_b).astype(jnp.bfloat16)
        acc_ref[...] = jnp.zeros_like(acc_ref)

    # ---- phase 2 (every k): streamed MLP reduction over the intermediate axis ----
    inter = _gelu_new(jnp.dot(ln2_ref[...], wi_ref[...],
                              preferred_element_type=jnp.float32) + bi_ref[...])   # (B*S, TI)
    acc_ref[...] += jnp.dot(inter.astype(jnp.bfloat16), wout_ref[...],
                            preferred_element_type=jnp.float32)                    # (B*S, H)

    # ---- finalize: bias + attention residual, single lane-dense writeback ----
    @pl.when(k == pl.num_programs(0) - 1)
    def _():
        bout = vecs_ref[5:6, :]
        out_ref[...] = acc_ref[...] + bout + attn_ref[...]


def alexatm_layer(x, kparams):
    """x: (B, S, H) float32; kparams: [wqkv, wo, wi, wout, vecs, bqkv, bi] (packed)."""
    x2 = x.reshape(B * S, H)                    # collapse batch: one row block
    out = pl.pallas_call(
        alexatm_layer_kernel,
        out_shape=jax.ShapeDtypeStruct((B * S, H), jnp.float32),
        grid_spec=pltpu.PrefetchScalarGridSpec(
            num_scalar_prefetch=0,
            grid=(I // TI,),
            in_specs=[
                pl.BlockSpec((B * S, H), lambda k: (0, 0)),     # x (resident)
                pl.BlockSpec((H, 3 * H), lambda k: (0, 0)),     # wqkv (resident)
                pl.BlockSpec((H, H), lambda k: (0, 0)),         # wo (resident)
                pl.BlockSpec((H, TI), lambda k: (0, k)),        # wi streamed over N(I)
                pl.BlockSpec((TI, H), lambda k: (k, 0)),        # wout streamed over K(I)
                pl.BlockSpec((6, H), lambda k: (0, 0)),         # vecs (LN affines + biases)
                pl.BlockSpec((1, 3 * H), lambda k: (0, 0)),     # bqkv
                pl.BlockSpec((1, TI), lambda k: (0, k)),        # bi streamed
            ],
            out_specs=pl.BlockSpec((B * S, H), lambda k: (0, 0)),
            scratch_shapes=[
                pltpu.VMEM((B * S, H), jnp.float32),    # attention_output (residual source)
                pltpu.VMEM((B * S, H), jnp.bfloat16),   # LN2 output (MLP input, bf16)
                pltpu.VMEM((B * S, H), jnp.float32),    # MLP f32 accumulator
            ]),
        compiler_params=pltpu.CompilerParams(
            # Reduction over the intermediate axis -> "arbitrary".
            # TODO(synk): add a leading "parallel" row-block axis at production sizes to use
            # v7x's second TensorCore.
            dimension_semantics=("arbitrary",),
            vmem_limit_bytes=32 * 1024 * 1024),
    )(x2, *kparams)
    return out.reshape(B, S, H)


def prepare_kernel_params(params):
    """Pack / fuse / pre-scale the 16 logical params into 7 kernel inputs."""
    (ln1_w, ln1_b, wq, bq, wk, bk, wv, bv, wo, bo,
     ln2_w, ln2_b, wi, bi, wout, bout) = params
    # Fused QKV, with the 1/sqrt(D) attention scale folded into the Q columns/bias.
    wqkv = jnp.concatenate([wq * SCALING, wk, wv], axis=1).astype(jnp.bfloat16)  # (H, 3H)
    bqkv = jnp.concatenate([bq * SCALING, bk, bv], axis=1)                       # (1, 3H) f32
    # One slab for all H-wide vectors: ln1_w, ln1_b, ln2_w, ln2_b, bo, bout.
    vecs = jnp.concatenate([ln1_w, ln1_b, ln2_w, ln2_b, bo, bout], axis=0)       # (6, H) f32
    # TODO(synk): on v7x, quantize wqkv/wi/wout to fp8 with per-tile scales (native fp8 MXU).
    return [wqkv,
            wo.astype(jnp.bfloat16),             # (H, H)
            wi.astype(jnp.bfloat16),             # (H, I)
            wout.astype(jnp.bfloat16),           # (I, H)
            vecs,
            bqkv,
            bi]                                  # (1, I) f32


def reference_forward(x, params):
    """Pure-JAX f32 mirror of the PyTorch forward (for validation)."""
    (ln1_w, ln1_b, wq, bq, wk, bk, wv, bv, wo, bo,
     ln2_w, ln2_b, wi, bi, wout, bout) = params
    hs = _atm_layer_norm(x, ln1_w, ln1_b)
    q = hs @ wq + bq
    k = hs @ wk + bk
    v = hs @ wv + bv

    def split_heads(t):  # (B,S,H) -> (B,NH,S,D)
        return t.reshape(B, S, NH, D).transpose(0, 2, 1, 3)

    qh, kh, vh = split_heads(q), split_heads(k), split_heads(v)
    scores = jnp.einsum("bhqd,bhkd->bhqk", qh, kh) * SCALING
    probs = jax.nn.softmax(scores, axis=-1)
    ctx = jnp.einsum("bhqk,bhkd->bhqd", probs, vh)
    ctx = ctx.transpose(0, 2, 1, 3).reshape(B, S, H)
    attn_out = ctx @ wo + bo + x
    ln2 = _atm_layer_norm(attn_out, ln2_w, ln2_b)
    inter = _gelu_new(ln2 @ wi + bi)
    return inter @ wout + bout + attn_out


def make_params(key):
    """Deterministic synthetic parameters (PyTorch shapes, then transposed to (in,out))."""
    keys = jax.random.split(key, 16)

    def lin(kw, kb, out_dim, in_dim):
        w = 0.02 * jax.random.normal(kw, (out_dim, in_dim), jnp.float32)   # torch (out,in)
        b = 0.02 * jax.random.normal(kb, (out_dim,), jnp.float32)
        return w.T, b.reshape(1, out_dim)                                  # kernel (in,out)

    ln1_w = (1.0 + 0.1 * jax.random.normal(keys[0], (H,), jnp.float32)).reshape(1, H)
    ln1_b = (0.1 * jax.random.normal(keys[1], (H,), jnp.float32)).reshape(1, H)
    wq, bq = lin(keys[2], keys[3], H, H)
    wk, bk = lin(keys[4], keys[5], H, H)
    wv, bv = lin(keys[6], keys[7], H, H)
    wo, bo = lin(keys[8], keys[9], H, H)
    ln2_w = (1.0 + 0.1 * jax.random.normal(keys[10], (H,), jnp.float32)).reshape(1, H)
    ln2_b = (0.1 * jax.random.normal(keys[11], (H,), jnp.float32)).reshape(1, H)
    wi, bi = lin(keys[12], keys[13], I, H)
    wout, bout = lin(keys[14], keys[15], H, I)
    return [ln1_w, ln1_b, wq, bq, wk, bk, wv, bv, wo, bo,
            ln2_w, ln2_b, wi, bi, wout, bout]


if __name__ == "__main__":
    root = jax.random.PRNGKey(0)
    kx, kp = jax.random.split(root)
    x = jax.random.normal(kx, (B, S, H), jnp.float32)
    params = make_params(kp)
    kparams = prepare_kernel_params(params)

    out = alexatm_layer(x, kparams)
    out = jax.block_until_ready(out)

    ref = reference_forward(x, params)
    assert out.shape == (B, S, H)
    # bf16 MXU operands + approx reciprocal relax numerics slightly; well within 2e-2.
    err = float(jnp.max(jnp.abs(out - ref)))
    assert jnp.allclose(out, ref, rtol=2e-2, atol=2e-2), err

    print("KERNEL_OK")
</pallas_src>

<mosaic_0001>
module attributes {stable_mosaic.version = 11 : i64} {
  func.func @alexatm_layer_kernel(%arg0: i32, %arg1: memref<16x32xf32, #tpu.memory_space<vmem>>, %arg2: memref<32x96xbf16, #tpu.memory_space<vmem>>, %arg3: memref<32x32xbf16, #tpu.memory_space<vmem>>, %arg4: memref<32x128xbf16, #tpu.memory_space<vmem>>, %arg5: memref<128x32xbf16, #tpu.memory_space<vmem>>, %arg6: memref<6x32xf32, #tpu.memory_space<vmem>>, %arg7: memref<1x96xf32, #tpu.memory_space<vmem>>, %arg8: memref<1x128xf32, #tpu.memory_space<vmem>>, %arg9: memref<16x32xf32, #tpu.memory_space<vmem>>, %arg10: memref<16x32xf32, #tpu.memory_space<vmem>>, %arg11: memref<16x32xbf16, #tpu.memory_space<vmem>>, %arg12: memref<16x32xf32, #tpu.memory_space<vmem>>) attributes {dimension_semantics = [#tpu.dimension_semantics<arbitrary>], iteration_bounds = array<i64: 2>, scalar_prefetch = 0 : i64, scratch_operands = 3 : i64, tpu.core_type = #tpu.core_type<tc>, window_params = [{pipeline_mode = #tpu.pipeline_mode<synchronous>, transform_indices = @transform_0, window_bounds = array<i64: 16, 32>}, {pipeline_mode = #tpu.pipeline_mode<synchronous>, transform_indices = @transform_1, window_bounds = array<i64: 32, 96>}, {pipeline_mode = #tpu.pipeline_mode<synchronous>, transform_indices = @transform_2, window_bounds = array<i64: 32, 32>}, {transform_indices = @transform_3, window_bounds = array<i64: 32, 128>}, {transform_indices = @transform_4, window_bounds = array<i64: 128, 32>}, {pipeline_mode = #tpu.pipeline_mode<synchronous>, transform_indices = @transform_5, window_bounds = array<i64: 6, 32>}, {pipeline_mode = #tpu.pipeline_mode<synchronous>, transform_indices = @transform_6, window_bounds = array<i64: 1, 96>}, {transform_indices = @transform_7, window_bounds = array<i64: 1, 128>}, {pipeline_mode = #tpu.pipeline_mode<synchronous>, transform_indices = @transform_8, window_bounds = array<i64: 16, 32>}]} {
    %c0_i32 = arith.constant 0 : i32
    %0 = arith.cmpi eq, %arg0, %c0_i32 : i32
    %1 = arith.extui %0 : i1 to i32
    %c0_i32_0 = arith.constant 0 : i32
    %2 = arith.cmpi ne, %1, %c0_i32_0 : i32
    scf.if %2 {
      %c0_18 = arith.constant 0 : index
      %c0_19 = arith.constant 0 : index
      %31 = vector.load %arg1[%c0_18, %c0_19] : memref<16x32xf32, #tpu.memory_space<vmem>>, vector<16x32xf32>
      %c0_20 = arith.constant 0 : index
      %c0_21 = arith.constant 0 : index
      %32 = vector.load %arg6[%c0_20, %c0_21] : memref<6x32xf32, #tpu.memory_space<vmem>>, vector<6x32xf32>
      %33 = vector.extract_strided_slice %32 {offsets = [0, 0], sizes = [1, 32], strides = [1, 1]} : vector<6x32xf32> to vector<1x32xf32>
      %34 = vector.extract_strided_slice %32 {offsets = [1, 0], sizes = [1, 32], strides = [1, 1]} : vector<6x32xf32> to vector<1x32xf32>
      %35 = vector.extract_strided_slice %32 {offsets = [2, 0], sizes = [1, 32], strides = [1, 1]} : vector<6x32xf32> to vector<1x32xf32>
      %36 = vector.extract_strided_slice %32 {offsets = [3, 0], sizes = [1, 32], strides = [1, 1]} : vector<6x32xf32> to vector<1x32xf32>
      %37 = vector.extract_strided_slice %32 {offsets = [4, 0], sizes = [1, 32], strides = [1, 1]} : vector<6x32xf32> to vector<1x32xf32>
      %38 = arith.mulf %31, %31 : vector<16x32xf32>
      %cst_22 = arith.constant dense<0.000000e+00> : vector<16xf32>
      %39 = vector.multi_reduction <add>, %38, %cst_22 [1] : vector<16x32xf32> to vector<16xf32>
      %40 = vector.shape_cast %39 : vector<16xf32> to vector<16x1xf32>
      %cst_23 = arith.constant 3.200000e+01 : f32
      %41 = vector.broadcast %cst_23 : f32 to vector<16x1xf32>
      %42 = arith.divf %40, %41 : vector<16x1xf32>
      %cst_24 = arith.constant dense<0.000000e+00> : vector<16xf32>
      %43 = vector.multi_reduction <add>, %31, %cst_24 [1] : vector<16x32xf32> to vector<16xf32>
      %44 = vector.shape_cast %43 : vector<16xf32> to vector<16x1xf32>
      %cst_25 = arith.constant 3.200000e+01 : f32
      %45 = vector.broadcast %cst_25 : f32 to vector<16x1xf32>
      %46 = arith.divf %44, %45 : vector<16x1xf32>
      %47 = vector.broadcast %46 : vector<16x1xf32> to vector<16x32xf32>
      %48 = arith.subf %31, %47 : vector<16x32xf32>
      %cst_26 = arith.constant 9.99999974E-6 : f32
      %49 = vector.broadcast %cst_26 : f32 to vector<16x1xf32>
      %50 = arith.addf %42, %49 : vector<16x1xf32>
      %51 = math.rsqrt %50 : vector<16x1xf32>
      %52 = vector.broadcast %51 : vector<16x1xf32> to vector<16x32xf32>
      %53 = arith.mulf %48, %52 : vector<16x32xf32>
      %54 = vector.broadcast %33 : vector<1x32xf32> to vector<16x32xf32>
      %55 = arith.mulf %53, %54 : vector<16x32xf32>
      %56 = vector.broadcast %34 : vector<1x32xf32> to vector<16x32xf32>
      %57 = arith.addf %55, %56 : vector<16x32xf32>
      %58 = arith.truncf %57 : vector<16x32xf32> to vector<16x32xbf16>
      %c0_27 = arith.constant 0 : index
      %c0_28 = arith.constant 0 : index
      %59 = vector.load %arg2[%c0_27, %c0_28] : memref<32x96xbf16, #tpu.memory_space<vmem>>, vector<32x96xbf16>
      %cst_29 = arith.constant dense<0.000000e+00> : vector<16x96xf32>
      %60 = tpu.matmul %58, %59, %cst_29 {dimension_numbers = #tpu.dot_dimension_numbers<[1], [0], [0], [1], [0, 0, 1, 1], [], []>} : vector<16x32xbf16>, vector<32x96xbf16>, vector<16x96xf32> -> vector<16x96xf32>
      %c0_30 = arith.constant 0 : index
      %c0_31 = arith.constant 0 : index
      %61 = vector.load %arg7[%c0_30, %c0_31] : memref<1x96xf32, #tpu.memory_space<vmem>>, vector<1x96xf32>
      %62 = vector.broadcast %61 : vector<1x96xf32> to vector<16x96xf32>
      %63 = arith.addf %60, %62 : vector<16x96xf32>
      %64 = vector.extract_strided_slice %63 {offsets = [0, 0], sizes = [16, 32], strides = [1, 1]} : vector<16x96xf32> to vector<16x32xf32>
      %65 = vector.extract_strided_slice %63 {offsets = [0, 32], sizes = [16, 32], strides = [1, 1]} : vector<16x96xf32> to vector<16x32xf32>
      %66 = vector.extract_strided_slice %63 {offsets = [0, 64], sizes = [16, 32], strides = [1, 1]} : vector<16x96xf32> to vector<16x32xf32>
      %67 = vector.extract_strided_slice %64 {offsets = [0, 0], sizes = [16, 8], strides = [1, 1]} : vector<16x32xf32> to vector<16x8xf32>
      %68 = vector.shape_cast %67 : vector<16x8xf32> to vector<2x8x8xf32>
      %69 = vector.extract_strided_slice %64 {offsets = [0, 8], sizes = [16, 8], strides = [1, 1]} : vector<16x32xf32> to vector<16x8xf32>
      %70 = vector.shape_cast %69 : vector<16x8xf32> to vector<2x8x8xf32>
      %71 = vector.extract_strided_slice %64 {offsets = [0, 16], sizes = [16, 8], strides = [1, 1]} : vector<16x32xf32> to vector<16x8xf32>
      %72 = vector.shape_cast %71 : vector<16x8xf32> to vector<2x8x8xf32>
      %73 = vector.extract_strided_slice %64 {offsets = [0, 24], sizes = [16, 8], strides = [1, 1]} : vector<16x32xf32> to vector<16x8xf32>
      %74 = vector.shape_cast %73 : vector<16x8xf32> to vector<2x8x8xf32>
      %75 = tpu.concatenate %68, %70, %72, %74 in 0 : vector<2x8x8xf32>, vector<2x8x8xf32>, vector<2x8x8xf32>, vector<2x8x8xf32> -> vector<8x8x8xf32>
      %76 = arith.truncf %75 : vector<8x8x8xf32> to vector<8x8x8xbf16>
      %77 = vector.extract_strided_slice %65 {offsets = [0, 0], sizes = [16, 8], strides = [1, 1]} : vector<16x32xf32> to vector<16x8xf32>
      %78 = vector.shape_cast %77 : vector<16x8xf32> to vector<2x8x8xf32>
      %79 = vector.extract_strided_slice %65 {offsets = [0, 8], sizes = [16, 8], strides = [1, 1]} : vector<16x32xf32> to vector<16x8xf32>
      %80 = vector.shape_cast %79 : vector<16x8xf32> to vector<2x8x8xf32>
      %81 = vector.extract_strided_slice %65 {offsets = [0, 16], sizes = [16, 8], strides = [1, 1]} : vector<16x32xf32> to vector<16x8xf32>
      %82 = vector.shape_cast %81 : vector<16x8xf32> to vector<2x8x8xf32>
      %83 = vector.extract_strided_slice %65 {offsets = [0, 24], sizes = [16, 8], strides = [1, 1]} : vector<16x32xf32> to vector<16x8xf32>
      %84 = vector.shape_cast %83 : vector<16x8xf32> to vector<2x8x8xf32>
      %85 = tpu.concatenate %78, %80, %82, %84 in 0 : vector<2x8x8xf32>, vector<2x8x8xf32>, vector<2x8x8xf32>, vector<2x8x8xf32> -> vector<8x8x8xf32>
      %86 = arith.truncf %85 : vector<8x8x8xf32> to vector<8x8x8xbf16>
      %87 = vector.extract_strided_slice %66 {offsets = [0, 0], sizes = [16, 8], strides = [1, 1]} : vector<16x32xf32> to vector<16x8xf32>
      %88 = vector.shape_cast %87 : vector<16x8xf32> to vector<2x8x8xf32>
      %89 = vector.extract_strided_slice %66 {offsets = [0, 8], sizes = [16, 8], strides = [1, 1]} : vector<16x32xf32> to vector<16x8xf32>
      %90 = vector.shape_cast %89 : vector<16x8xf32> to vector<2x8x8xf32>
      %91 = vector.extract_strided_slice %66 {offsets = [0, 16], sizes = [16, 8], strides = [1, 1]} : vector<16x32xf32> to vector<16x8xf32>
      %92 = vector.shape_cast %91 : vector<16x8xf32> to vector<2x8x8xf32>
      %93 = vector.extract_strided_slice %66 {offsets = [0, 24], sizes = [16, 8], strides = [1, 1]} : vector<16x32xf32> to vector<16x8xf32>
      %94 = vector.shape_cast %93 : vector<16x8xf32> to vector<2x8x8xf32>
      %95 = tpu.concatenate %88, %90, %92, %94 in 0 : vector<2x8x8xf32>, vector<2x8x8xf32>, vector<2x8x8xf32>, vector<2x8x8xf32> -> vector<8x8x8xf32>
      %96 = arith.truncf %95 : vector<8x8x8xf32> to vector<8x8x8xbf16>
      "tpu.trace_start"() <{level = 10 : i32, message = "bqd,bkd->bqk"}> : () -> ()
      %cst_32 = arith.constant dense<0.000000e+00> : vector<8x8x8xf32>
      %97 = tpu.matmul %76, %86, %cst_32 {dimension_numbers = #tpu.dot_dimension_numbers<[2], [2], [1], [1], [0, 0, 0, 1, 1, 1], [0], [0]>} : vector<8x8x8xbf16>, vector<8x8x8xbf16>, vector<8x8x8xf32> -> vector<8x8x8xf32>
      "tpu.trace_stop"() : () -> ()
      %cst_33 = arith.constant dense<0xFF800000> : vector<8x8xf32>
      %98 = vector.multi_reduction <maximumf>, %97, %cst_33 [2] : vector<8x8x8xf32> to vector<8x8xf32>
      %99 = vector.shape_cast %98 : vector<8x8xf32> to vector<8x8x1xf32>
      %100 = vector.broadcast %99 : vector<8x8x1xf32> to vector<8x8x8xf32>
      %101 = arith.subf %97, %100 : vector<8x8x8xf32>
      %102 = math.exp %101 : vector<8x8x8xf32>
      %cst_34 = arith.constant dense<0.000000e+00> : vector<8x8xf32>
      %103 = vector.multi_reduction <add>, %102, %cst_34 [2] : vector<8x8x8xf32> to vector<8x8xf32>
      %104 = vector.shape_cast %103 : vector<8x8xf32> to vector<8x8x1xf32>
      %105 = tpu.reciprocal %104 {approx = true} : vector<8x8x1xf32> -> vector<8x8x1xf32>
      %106 = vector.broadcast %105 : vector<8x8x1xf32> to vector<8x8x8xf32>
      %107 = arith.mulf %102, %106 : vector<8x8x8xf32>
      %108 = arith.truncf %107 : vector<8x8x8xf32> to vector<8x8x8xbf16>
      "tpu.trace_start"() <{level = 10 : i32, message = "bqk,bkd->bqd"}> : () -> ()
      %cst_35 = arith.constant dense<0.000000e+00> : vector<8x8x8xf32>
      %109 = tpu.matmul %108, %96, %cst_35 {dimension_numbers = #tpu.dot_dimension_numbers<[2], [1], [1], [2], [0, 0, 0, 1, 1, 2], [0], [0]>} : vector<8x8x8xbf16>, vector<8x8x8xbf16>, vector<8x8x8xf32> -> vector<8x8x8xf32>
      "tpu.trace_stop"() : () -> ()
      %110 = vector.extract_strided_slice %109 {offsets = [0, 0, 0], sizes = [2, 8, 8], strides = [1, 1, 1]} : vector<8x8x8xf32> to vector<2x8x8xf32>
      %111 = vector.shape_cast %110 : vector<2x8x8xf32> to vector<16x8xf32>
      %112 = vector.extract_strided_slice %109 {offsets = [2, 0, 0], sizes = [2, 8, 8], strides = [1, 1, 1]} : vector<8x8x8xf32> to vector<2x8x8xf32>
      %113 = vector.shape_cast %112 : vector<2x8x8xf32> to vector<16x8xf32>
      %114 = vector.extract_strided_slice %109 {offsets = [4, 0, 0], sizes = [2, 8, 8], strides = [1, 1, 1]} : vector<8x8x8xf32> to vector<2x8x8xf32>
      %115 = vector.shape_cast %114 : vector<2x8x8xf32> to vector<16x8xf32>
      %116 = vector.extract_strided_slice %109 {offsets = [6, 0, 0], sizes = [2, 8, 8], strides = [1, 1, 1]} : vector<8x8x8xf32> to vector<2x8x8xf32>
      %117 = vector.shape_cast %116 : vector<2x8x8xf32> to vector<16x8xf32>
      %118 = tpu.concatenate %111, %113, %115, %117 in 1 : vector<16x8xf32>, vector<16x8xf32>, vector<16x8xf32>, vector<16x8xf32> -> vector<16x32xf32>
      %119 = arith.truncf %118 : vector<16x32xf32> to vector<16x32xbf16>
      %c0_36 = arith.constant 0 : index
      %c0_37 = arith.constant 0 : index
      %120 = vector.load %arg3[%c0_36, %c0_37] : memref<32x32xbf16, #tpu.memory_space<vmem>>, vector<32x32xbf16>
      %cst_38 = arith.constant dense<0.000000e+00> : vector<16x32xf32>
      %121 = tpu.matmul %119, %120, %cst_38 {dimension_numbers = #tpu.dot_dimension_numbers<[1], [0], [0], [1], [0, 0, 1, 1], [], []>} : vector<16x32xbf16>, vector<32x32xbf16>, vector<16x32xf32> -> vector<16x32xf32>
      %122 = vector.broadcast %37 : vector<1x32xf32> to vector<16x32xf32>
      %123 = arith.addf %121, %122 : vector<16x32xf32>
      %124 = arith.addf %123, %31 : vector<16x32xf32>
      %c0_39 = arith.constant 0 : index
      %c0_40 = arith.constant 0 : index
      %125 = vector.load %arg10[%c0_39, %c0_40] : memref<16x32xf32, #tpu.memory_space<vmem>>, vector<16x32xf32>
      tpu.vector_store %arg10[%c0_39, %c0_40], %124 {strides = array<i32>} : memref<16x32xf32, #tpu.memory_space<vmem>>, vector<16x32xf32>,
      %126 = arith.mulf %124, %124 : vector<16x32xf32>
      %cst_41 = arith.constant dense<0.000000e+00> : vector<16xf32>
      %127 = vector.multi_reduction <add>, %126, %cst_41 [1] : vector<16x32xf32> to vector<16xf32>
      %128 = vector.shape_cast %127 : vector<16xf32> to vector<16x1xf32>
      %cst_42 = arith.constant 3.200000e+01 : f32
      %129 = vector.broadcast %cst_42 : f32 to vector<16x1xf32>
      %130 = arith.divf %128, %129 : vector<16x1xf32>
      %cst_43 = arith.constant dense<0.000000e+00> : vector<16xf32>
      %131 = vector.multi_reduction <add>, %124, %cst_43 [1] : vector<16x32xf32> to vector<16xf32>
      %132 = vector.shape_cast %131 : vector<16xf32> to vector<16x1xf32>
      %cst_44 = arith.constant 3.200000e+01 : f32
      %133 = vector.broadcast %cst_44 : f32 to vector<16x1xf32>
      %134 = arith.divf %132, %133 : vector<16x1xf32>
      %135 = vector.broadcast %134 : vector<16x1xf32> to vector<16x32xf32>
      %136 = arith.subf %124, %135 : vector<16x32xf32>
      %cst_45 = arith.constant 9.99999974E-6 : f32
      %137 = vector.broadcast %cst_45 : f32 to vector<16x1xf32>
      %138 = arith.addf %130, %137 : vector<16x1xf32>
      %139 = math.rsqrt %138 : vector<16x1xf32>
      %140 = vector.broadcast %139 : vector<16x1xf32> to vector<16x32xf32>
      %141 = arith.mulf %136, %140 : vector<16x32xf32>
      %142 = vector.broadcast %35 : vector<1x32xf32> to vector<16x32xf32>
      %143 = arith.mulf %141, %142 : vector<16x32xf32>
      %144 = vector.broadcast %36 : vector<1x32xf32> to vector<16x32xf32>
      %145 = arith.addf %143, %144 : vector<16x32xf32>
      %146 = arith.truncf %145 : vector<16x32xf32> to vector<16x32xbf16>
      %c0_46 = arith.constant 0 : index
      %c0_47 = arith.constant 0 : index
      %147 = vector.load %arg11[%c0_46, %c0_47] : memref<16x32xbf16, #tpu.memory_space<vmem>>, vector<16x32xbf16>
      tpu.vector_store %arg11[%c0_46, %c0_47], %146 {strides = array<i32>} : memref<16x32xbf16, #tpu.memory_space<vmem>>, vector<16x32xbf16>,
      %cst_48 = arith.constant 0.000000e+00 : f32
      %148 = vector.broadcast %cst_48 : f32 to vector<16x32xf32>
      %c0_49 = arith.constant 0 : index
      %c0_50 = arith.constant 0 : index
      %149 = vector.load %arg12[%c0_49, %c0_50] : memref<16x32xf32, #tpu.memory_space<vmem>>, vector<16x32xf32>
      tpu.vector_store %arg12[%c0_49, %c0_50], %148 {strides = array<i32>} : memref<16x32xf32, #tpu.memory_space<vmem>>, vector<16x32xf32>,
    } else {
    }
    %c0 = arith.constant 0 : index
    %c0_1 = arith.constant 0 : index
    %3 = vector.load %arg11[%c0, %c0_1] : memref<16x32xbf16, #tpu.memory_space<vmem>>, vector<16x32xbf16>
    %c0_2 = arith.constant 0 : index
    %c0_3 = arith.constant 0 : index
    %4 = vector.load %arg4[%c0_2, %c0_3] : memref<32x128xbf16, #tpu.memory_space<vmem>>, vector<32x128xbf16>
    %cst = arith.constant dense<0.000000e+00> : vector<16x128xf32>
    %5 = tpu.matmul %3, %4, %cst {dimension_numbers = #tpu.dot_dimension_numbers<[1], [0], [0], [1], [0, 0, 1, 1], [], []>} : vector<16x32xbf16>, vector<32x128xbf16>, vector<16x128xf32> -> vector<16x128xf32>
    %c0_4 = arith.constant 0 : index
    %c0_5 = arith.constant 0 : index
    %6 = vector.load %arg8[%c0_4, %c0_5] : memref<1x128xf32, #tpu.memory_space<vmem>>, vector<1x128xf32>
    %7 = vector.broadcast %6 : vector<1x128xf32> to vector<16x128xf32>
    %8 = arith.addf %5, %7 : vector<16x128xf32>
    %cst_6 = arith.constant 5.000000e-01 : f32
    %9 = vector.broadcast %cst_6 : f32 to vector<16x128xf32>
    %10 = arith.mulf %9, %8 : vector<16x128xf32>
    %cst_7 = arith.constant 4.471500e-02 : f32
    %11 = vector.broadcast %cst_7 : f32 to vector<16x128xf32>
    %12 = arith.mulf %11, %8 : vector<16x128xf32>
    %13 = arith.mulf %12, %8 : vector<16x128xf32>
    %14 = arith.mulf %13, %8 : vector<16x128xf32>
    %15 = arith.addf %8, %14 : vector<16x128xf32>
    %cst_8 = arith.constant 0.797884583 : f32
    %16 = vector.broadcast %cst_8 : f32 to vector<16x128xf32>
    %17 = arith.mulf %16, %15 : vector<16x128xf32>
    %18 = math.tanh %17 : vector<16x128xf32>
    %cst_9 = arith.constant 1.000000e+00 : f32
    %19 = vector.broadcast %cst_9 : f32 to vector<16x128xf32>
    %20 = arith.addf %19, %18 : vector<16x128xf32>
    %21 = arith.mulf %10, %20 : vector<16x128xf32>
    %c0_10 = arith.constant 0 : index
    %c0_11 = arith.constant 0 : index
    %22 = vector.load %arg12[%c0_10, %c0_11] : memref<16x32xf32, #tpu.memory_space<vmem>>, vector<16x32xf32>
    %23 = arith.truncf %21 : vector<16x128xf32> to vector<16x128xbf16>
    %c0_12 = arith.constant 0 : index
    %c0_13 = arith.constant 0 : index
    %24 = vector.load %arg5[%c0_12, %c0_13] : memref<128x32xbf16, #tpu.memory_space<vmem>>, vector<128x32xbf16>
    %cst_14 = arith.constant dense<0.000000e+00> : vector<16x32xf32>
    %25 = tpu.matmul %23, %24, %cst_14 {dimension_numbers = #tpu.dot_dimension_numbers<[1], [0], [0], [1], [0, 0, 1, 1], [], []>} : vector<16x128xbf16>, vector<128x32xbf16>, vector<16x32xf32> -> vector<16x32xf32>
    %26 = arith.addf %22, %25 : vector<16x32xf32>
    %c0_15 = arith.constant 0 : index
    %c0_16 = arith.constant 0 : index
    %27 = vector.load %arg12[%c0_15, %c0_16] : memref<16x32xf32, #tpu.memory_space<vmem>>, vector<16x32xf32>
    tpu.vector_store %arg12[%c0_15, %c0_16], %26 {strides = array<i32>} : memref<16x32xf32, #tpu.memory_space<vmem>>, vector<16x32xf32>,
    %c1_i32 = arith.constant 1 : i32
    %28 = arith.cmpi eq, %arg0, %c1_i32 : i32
    %29 = arith.extui %28 : i1 to i32
    %c0_i32_17 = arith.constant 0 : i32
    %30 = arith.cmpi ne, %29, %c0_i32_17 : i32
    scf.if %30 {
      %c5 = arith.constant 5 : index
      %c0_18 = arith.constant 0 : index
      %31 = vector.load %arg6[%c5, %c0_18] : memref<6x32xf32, #tpu.memory_space<vmem>>, vector<1x32xf32>
      %c0_19 = arith.constant 0 : index
      %c0_20 = arith.constant 0 : index
      %32 = vector.load %arg12[%c0_19, %c0_20] : memref<16x32xf32, #tpu.memory_space<vmem>>, vector<16x32xf32>
      %33 = vector.broadcast %31 : vector<1x32xf32> to vector<16x32xf32>
      %34 = arith.addf %32, %33 : vector<16x32xf32>
      %c0_21 = arith.constant 0 : index
      %c0_22 = arith.constant 0 : index
      %35 = vector.load %arg10[%c0_21, %c0_22] : memref<16x32xf32, #tpu.memory_space<vmem>>, vector<16x32xf32>
      %36 = arith.addf %34, %35 : vector<16x32xf32>
      %c0_23 = arith.constant 0 : index
      %c0_24 = arith.constant 0 : index
      %37 = vector.load %arg9[%c0_23, %c0_24] : memref<16x32xf32, #tpu.memory_space<vmem>>, vector<16x32xf32>
      tpu.vector_store %arg9[%c0_23, %c0_24], %36 {strides = array<i32>} : memref<16x32xf32, #tpu.memory_space<vmem>>, vector<16x32xf32>,
    } else {
    }
    return
  }
  func.func @transform_0(%arg0: i32) -> (i32, i32) {
    %c0_i32 = arith.constant 0 : i32
    %c0_i32_0 = arith.constant 0 : i32
    %c0_i32_1 = arith.constant 0 : i32
    return %c0_i32, %c0_i32_0 : i32, i32
  }
  func.func @transform_1(%arg0: i32) -> (i32, i32) {
    %c0_i32 = arith.constant 0 : i32
    %c0_i32_0 = arith.constant 0 : i32
    %c0_i32_1 = arith.constant 0 : i32
    return %c0_i32, %c0_i32_0 : i32, i32
  }
  func.func @transform_2(%arg0: i32) -> (i32, i32) {
    %c0_i32 = arith.constant 0 : i32
    %c0_i32_0 = arith.constant 0 : i32
    %c0_i32_1 = arith.constant 0 : i32
    return %c0_i32, %c0_i32_0 : i32, i32
  }
  func.func @transform_3(%arg0: i32) -> (i32, i32) {
    %c0_i32 = arith.constant 0 : i32
    %c0_i32_0 = arith.constant 0 : i32
    return %c0_i32, %arg0 : i32, i32
  }
  func.func @transform_4(%arg0: i32) -> (i32, i32) {
    %c0_i32 = arith.constant 0 : i32
    %c0_i32_0 = arith.constant 0 : i32
    return %arg0, %c0_i32 : i32, i32
  }
  func.func @transform_5(%arg0: i32) -> (i32, i32) {
    %c0_i32 = arith.constant 0 : i32
    %c0_i32_0 = arith.constant 0 : i32
    %c0_i32_1 = arith.constant 0 : i32
    return %c0_i32, %c0_i32_0 : i32, i32
  }
  func.func @transform_6(%arg0: i32) -> (i32, i32) {
    %c0_i32 = arith.constant 0 : i32
    %c0_i32_0 = arith.constant 0 : i32
    %c0_i32_1 = arith.constant 0 : i32
    return %c0_i32, %c0_i32_0 : i32, i32
  }
  func.func @transform_7(%arg0: i32) -> (i32, i32) {
    %c0_i32 = arith.constant 0 : i32
    %c0_i32_0 = arith.constant 0 : i32
    return %c0_i32, %arg0 : i32, i32
  }
  func.func @transform_8(%arg0: i32) -> (i32, i32) {
    %c0_i32 = arith.constant 0 : i32
    %c0_i32_0 = arith.constant 0 : i32
    %c0_i32_1 = arith.constant 0 : i32
    return %c0_i32, %c0_i32_0 : i32, i32
  }
}

</mosaic_0001>

<llo_original>
// kernel: tpu_custom_call.1
$region0: #{tpu_custom_call.1}
  #allocation0 [shape = 'u32[]', space=smem, size = 0x4, offset = 0x4, fixed_abs, tag = 'smem constant byte address 0x4 - core index']
  #allocation1 [shape = 'u32[72,128]{1,0:T(1,128)}', space=vmem, size = 0x9000, scoped, tag = 'internal scratch']
  #allocation2 [shape = 'f32[16,32]{1,0:T(8,128)}', space=vmem, size = 0x2000, scoped, tag = 'scratch operand']
  #allocation3 [shape = 'bf16[16,32]{1,0:T(8,128)(2,1)}', space=vmem, size = 0x1000, scoped, tag = 'scratch operand']
  #allocation4 [shape = 'f32[16,32]{1,0:T(8,128)}', space=vmem, size = 0x2000, scoped, tag = 'scratch operand']
  %s0 = inlined_call_operand.vmem [shape: f32[16,32], index: 0, kind: input, shape index: {}]
  %s1 = inlined_call_operand.vmem [shape: bf16[32,96], index: 1, kind: input, shape index: {}]
  %s2 = inlined_call_operand.vmem [shape: bf16[32,32], index: 2, kind: input, shape index: {}]
  %s3 = inlined_call_operand.vmem [shape: bf16[32,256], index: 3, kind: input, shape index: {}]
  %s4 = inlined_call_operand.vmem [shape: bf16[256,32], index: 4, kind: input, shape index: {}]
  %s5 = inlined_call_operand.vmem [shape: f32[6,32], index: 5, kind: input, shape index: {}]
  %s6 = inlined_call_operand.vmem [shape: f32[1,96], index: 6, kind: input, shape index: {}]
  %s7 = inlined_call_operand.vmem [shape: f32[1,256], index: 7, kind: input, shape index: {}]
  %s8 = inlined_call_operand.hbm [shape: f32[16,32], index: 8, kind: output, shape index: {}]
  %s9 = sld [smem:[#allocation0]]
  $region114: #{tpu_custom_call.1} parent=0
    _
  %s11 = ssub.s32 1, %s9
  %s12 = scalar_select 0, %s11, %s9
  $region1: #{tpu_custom_call.1} parent=0
    #allocation5 [shape = 'u8[16384]{0}', space=vmem, size = 0x4000, scoped, tag = 'input window, operand 3']
    #allocation6 [shape = 'u8[8192]{0}', space=vmem, size = 0x2000, scoped, tag = 'output window, operand 0, single buffered']
    #allocation7 [shape = 's32[2]{0}', space=sflag, size = 0x8, scoped, tag = 'scoped memory for tpu_custom_call.1']
    %13 = vsyncpa [#allocation7], 0
    loop: start=0, step=1, limit=4
    $region2: #{tpu_custom_call.1} parent=1 // loop_pre_header
      _
    $region3: #{tpu_custom_call.1} parent=1 // loop_header
      %s15 = sphi 0, %s19
      %p16 = scmp.ge.s32.totalorder %s15, 4
      %s23 = sphi 0, %s23
      %s25 = sphi 0, %s23
      %s26 = sphi 0, %s25
      %s40 = sphi 0, %s26
      %s44 = sphi 0, %s44
      %s46 = sphi 0, %s44
      %s47 = sphi 0, %s46
      %s61 = sphi 0, %s47
      %s65 = sphi 0, %s65
      %s67 = sphi 0, %s65
      %s68 = sphi 0, %s67
      %s82 = sphi 0, %s68
      %s88 = sphi 0, %s90
      %s91 = sphi 0, %s88
      %s92 = sphi 0, %s91
      %s108 = sphi 0, %s92
      %s114 = sphi 0, %s116
      %s117 = sphi 0, %s114
      %s118 = sphi 0, %s117
      %s134 = sphi 0, %s118
      %s138 = sphi 0, %s138
      %s140 = sphi 0, %s138
      %s141 = sphi 0, %s140
      %s155 = sphi 0, %s141
      %s159 = sphi 0, %s159
      %s161 = sphi 0, %s159
      %s162 = sphi 0, %s161
      %s176 = sphi 0, %s162
      %s182 = sphi 0, %s184
      %s185 = sphi 0, %s182
      %s186 = sphi 0, %s185
      %s202 = sphi 0, %s186
      %s206 = sphi 0, %s206
      %s208 = sphi 0, %s206
      %s209 = sphi 0, %s208
      %s223 = sphi 0, %s209
    $region4: #{tpu_custom_call.1} parent=1 // loop_header_branch
      %18 = sbr.rel (%p16) target = $region8
    $region5: #{tpu_custom_call.1} parent=1 // loop_body
      %s20 = ssub.s32 %s15, 1
      %s21 = ssub.s32 %s15, 2
      %s22 = sadd.s32 %s15, 1
      %s24 = sadd.s32 %s23, 1
      %p27 = scmp.eq.s32.totalorder %s15, 1
      %p28 = scmp.ne.s32.totalorder %s23, %s25
      %p29 = scmp.eq.s32.totalorder %s15, 0
      %p30 = por %p28, %p29
      %p31 = scmp.ne.s32.totalorder %s23, %s25
      %p32 = scmp.eq.s32.totalorder %s20, 1
      %p33 = por %p31, %p32
      %p34 = scmp.ne.s32.totalorder %s25, %s26
      %p35 = scmp.eq.s32.totalorder %s20, 0
      %p36 = por %p34, %p35
      %p37 = scmp.ne.s32.totalorder %s25, %s26
      %p38 = scmp.eq.s32.totalorder %s21, 1
      %p39 = por %p37, %p38
      %p41 = scmp.ne.s32.totalorder %s26, %s40
      %p42 = scmp.eq.s32.totalorder %s21, 0
      %p43 = por %p41, %p42
      %s45 = sadd.s32 %s44, 1
      %p48 = scmp.eq.s32.totalorder %s15, 1
      %p49 = scmp.ne.s32.totalorder %s44, %s46
      %p50 = scmp.eq.s32.totalorder %s15, 0
      %p51 = por %p49, %p50
      %p52 = scmp.ne.s32.totalorder %s44, %s46
      %p53 = scmp.eq.s32.totalorder %s20, 1
      %p54 = por %p52, %p53
      %p55 = scmp.ne.s32.totalorder %s46, %s47
      %p56 = scmp.eq.s32.totalorder %s20, 0
      %p57 = por %p55, %p56
      %p58 = scmp.ne.s32.totalorder %s46, %s47
      %p59 = scmp.eq.s32.totalorder %s21, 1
      %p60 = por %p58, %p59
      %p62 = scmp.ne.s32.totalorder %s47, %s61
      %p63 = scmp.eq.s32.totalorder %s21, 0
      %p64 = por %p62, %p63
      %s66 = sadd.s32 %s65, 1
      %p69 = scmp.eq.s32.totalorder %s15, 1
      %p70 = scmp.ne.s32.totalorder %s65, %s67
      %p71 = scmp.eq.s32.totalorder %s15, 0
      %p72 = por %p70, %p71
      %p73 = scmp.ne.s32.totalorder %s65, %s67
      %p74 = scmp.eq.s32.totalorder %s20, 1
      %p75 = por %p73, %p74
      %p76 = scmp.ne.s32.totalorder %s67, %s68
      %p77 = scmp.eq.s32.totalorder %s20, 0
      %p78 = por %p76, %p77
      %p79 = scmp.ne.s32.totalorder %s67, %s68
      %p80 = scmp.eq.s32.totalorder %s21, 1
      %p81 = por %p79, %p80
      %p83 = scmp.ne.s32.totalorder %s68, %s82
      %p84 = scmp.eq.s32.totalorder %s21, 0
      %p85 = por %p83, %p84
      %s86 = ssub.s32 %s15, %s22
      %p87 = scmp.eq.s32.totalorder %s86, 0
      %s89 = sadd.s32 %s88, 1
      %s90 = scalar_select %p87, %s88, %s89
      %p93 = pneg %p87
      %p94 = scmp.eq.s32.totalorder %s15, 1
      %p95 = por %p93, %p94
      %p96 = scmp.ne.s32.totalorder %s88, %s91
      %p97 = scmp.eq.s32.totalorder %s15, 0
      %p98 = por %p96, %p97
      %p99 = scmp.ne.s32.totalorder %s88, %s91
      %p100 = scmp.eq.s32.totalorder %s20, 1
      %p101 = por %p99, %p100
      %p102 = scmp.ne.s32.totalorder %s91, %s92
      %p103 = scmp.eq.s32.totalorder %s20, 0
      %p104 = por %p102, %p103
      %p105 = scmp.ne.s32.totalorder %s91, %s92
      %p106 = scmp.eq.s32.totalorder %s21, 1
      %p107 = por %p105, %p106
      %p109 = scmp.ne.s32.totalorder %s92, %s108
      %p110 = scmp.eq.s32.totalorder %s21, 0
      %p111 = por %p109, %p110
      %s112 = ssub.s32 %s15, %s22
      %p113 = scmp.eq.s32.totalorder %s112, 0
      %s115 = sadd.s32 %s114, 1
      %s116 = scalar_select %p113, %s114, %s115
      %p119 = pneg %p113
      %p120 = scmp.eq.s32.totalorder %s15, 1
      %p121 = por %p119, %p120
      %p122 = scmp.ne.s32.totalorder %s114, %s117
      %p123 = scmp.eq.s32.totalorder %s15, 0
      %p124 = por %p122, %p123
      %p125 = scmp.ne.s32.totalorder %s114, %s117
      %p126 = scmp.eq.s32.totalorder %s20, 1
      %p127 = por %p125, %p126
      %p128 = scmp.ne.s32.totalorder %s117, %s118
      %p129 = scmp.eq.s32.totalorder %s20, 0
      %p130 = por %p128, %p129
      %p131 = scmp.ne.s32.totalorder %s117, %s118
      %p132 = scmp.eq.s32.totalorder %s21, 1
      %p133 = por %p131, %p132
      %p135 = scmp.ne.s32.totalorder %s118, %s134
      %p136 = scmp.eq.s32.totalorder %s21, 0
      %p137 = por %p135, %p136
      %s139 = sadd.s32 %s138, 1
      %p142 = scmp.eq.s32.totalorder %s15, 1
      %p143 = scmp.ne.s32.totalorder %s138, %s140
      %p144 = scmp.eq.s32.totalorder %s15, 0
      %p145 = por %p143, %p144
      %p146 = scmp.ne.s32.totalorder %s138, %s140
      %p147 = scmp.eq.s32.totalorder %s20, 1
      %p148 = por %p146, %p147
      %p149 = scmp.ne.s32.totalorder %s140, %s141
      %p150 = scmp.eq.s32.totalorder %s20, 0
      %p151 = por %p149, %p150
      %p152 = scmp.ne.s32.totalorder %s140, %s141
      %p153 = scmp.eq.s32.totalorder %s21, 1
      %p154 = por %p152, %p153
      %p156 = scmp.ne.s32.totalorder %s141, %s155
      %p157 = scmp.eq.s32.totalorder %s21, 0
      %p158 = por %p156, %p157
      %s160 = sadd.s32 %s159, 1
      %p163 = scmp.eq.s32.totalorder %s15, 1
      %p164 = scmp.ne.s32.totalorder %s159, %s161
      %p165 = scmp.eq.s32.totalorder %s15, 0
      %p166 = por %p164, %p165
      %p167 = scmp.ne.s32.totalorder %s159, %s161
      %p168 = scmp.eq.s32.totalorder %s20, 1
      %p169 = por %p167, %p168
      %p170 = scmp.ne.s32.totalorder %s161, %s162
      %p171 = scmp.eq.s32.totalorder %s20, 0
      %p172 = por %p170, %p171
      %p173 = scmp.ne.s32.totalorder %s161, %s162
      %p174 = scmp.eq.s32.totalorder %s21, 1
      %p175 = por %p173, %p174
      %p177 = scmp.ne.s32.totalorder %s162, %s176
      %p178 = scmp.eq.s32.totalorder %s21, 0
      %p179 = por %p177, %p178
      %s180 = ssub.s32 %s15, %s22
      %p181 = scmp.eq.s32.totalorder %s180, 0
      %s183 = sadd.s32 %s182, 1
      %s184 = scalar_select %p181, %s182, %s183
      %p187 = pneg %p181
      %p188 = scmp.eq.s32.totalorder %s15, 1
      %p189 = por %p187, %p188
      %p190 = scmp.ne.s32.totalorder %s182, %s185
      %p191 = scmp.eq.s32.totalorder %s15, 0
      %p192 = por %p190, %p191
      %p193 = scmp.ne.s32.totalorder %s182, %s185
      %p194 = scmp.eq.s32.totalorder %s20, 1
      %p195 = por %p193, %p194
      %p196 = scmp.ne.s32.totalorder %s185, %s186
      %p197 = scmp.eq.s32.totalorder %s20, 0
      %p198 = por %p196, %p197
      %p199 = scmp.ne.s32.totalorder %s185, %s186
      %p200 = scmp.eq.s32.totalorder %s21, 1
      %p201 = por %p199, %p200
      %p203 = scmp.ne.s32.totalorder %s186, %s202
      %p204 = scmp.eq.s32.totalorder %s21, 0
      %p205 = por %p203, %p204
      %s207 = sadd.s32 %s206, 1
      %p210 = scmp.eq.s32.totalorder %s15, 1
      %p211 = scmp.ne.s32.totalorder %s206, %s208
      %p212 = scmp.eq.s32.totalorder %s15, 0
      %p213 = por %p211, %p212
      %p214 = scmp.ne.s32.totalorder %s206, %s208
      %p215 = scmp.eq.s32.totalorder %s20, 1
      %p216 = por %p214, %p215
      %p217 = scmp.ne.s32.totalorder %s208, %s209
      %p218 = scmp.eq.s32.totalorder %s20, 0
      %p219 = por %p217, %p218
      %p220 = scmp.ne.s32.totalorder %s208, %s209
      %p221 = scmp.eq.s32.totalorder %s21, 1
      %p222 = por %p220, %p221
      %p224 = scmp.ne.s32.totalorder %s209, %s223
      %p225 = scmp.eq.s32.totalorder %s21, 0
      %p226 = por %p224, %p225
      %p227 = scmp.le.s32.totalorder 1, %s15
      %p228 = scmp.lt.s32.totalorder %s15, 3
      %p229 = pnand %p227, %p228
      %p230 = pneg %p229
      // Predicated region
      $region9: #{tpu_custom_call.1} parent=5 // pred_check
        _
      $region10: #{tpu_custom_call.1} parent=5 // pred_check_branch
        %232 = sbr.rel (%p229) target = $region12
      $region11: #{tpu_custom_call.1} parent=5 // pred_region
        %s233 = ssub.s32 %s15, 1
        // Predicated region
        $region13: #{tpu_custom_call.1} parent=11 // pred_check
          %p234 = pneg %p36
        $region14: #{tpu_custom_call.1} parent=11 // pred_check_branch
          %236 = sbr.rel (%p234) target = $region16
        $region15: #{tpu_custom_call.1} parent=11 // pred_region
          _
        $region16: #{tpu_custom_call.1} parent=11 // pred_fallthru
          _
        // Predicated region
        $region17: #{tpu_custom_call.1} parent=11 // pred_check
          %p237 = pneg %p57
        $region18: #{tpu_custom_call.1} parent=11 // pred_check_branch
          %239 = sbr.rel (%p237) target = $region20
        $region19: #{tpu_custom_call.1} parent=11 // pred_region
          _
        $region20: #{tpu_custom_call.1} parent=11 // pred_fallthru
          _
        // Predicated region
        $region21: #{tpu_custom_call.1} parent=11 // pred_check
          %p240 = pneg %p78
        $region22: #{tpu_custom_call.1} parent=11 // pred_check_branch
          %242 = sbr.rel (%p240) target = $region24
        $region23: #{tpu_custom_call.1} parent=11 // pred_region
          _
        $region24: #{tpu_custom_call.1} parent=11 // pred_fallthru
          _
        // Predicated region
        $region25: #{tpu_custom_call.1} parent=11 // pred_check
          %p243 = pneg %p151
        $region26: #{tpu_custom_call.1} parent=11 // pred_check_branch
          %245 = sbr.rel (%p243) target = $region28
        $region27: #{tpu_custom_call.1} parent=11 // pred_region
          _
        $region28: #{tpu_custom_call.1} parent=11 // pred_fallthru
          _
        // Predicated region
        $region29: #{tpu_custom_call.1} parent=11 // pred_check
          %p246 = pneg %p172
        $region30: #{tpu_custom_call.1} parent=11 // pred_check_branch
          %248 = sbr.rel (%p246) target = $region32
        $region31: #{tpu_custom_call.1} parent=11 // pred_region
          _
        $region32: #{tpu_custom_call.1} parent=11 // pred_fallthru
          _
      $region12: #{tpu_custom_call.1} parent=5 // pred_fallthru
        _
      %p249 = scmp.lt.s32.totalorder %s15, 2
      // Predicated region
      $region33: #{tpu_custom_call.1} parent=5 // pred_check
        %p250 = pneg %p249
      $region34: #{tpu_custom_call.1} parent=5 // pred_check_branch
        %252 = sbr.rel (%p250) target = $region36
      $region35: #{tpu_custom_call.1} parent=5 // pred_region
        // Predicated region
        $region37: #{tpu_custom_call.1} parent=35 // pred_check
          %p253 = pneg %p98
        $region38: #{tpu_custom_call.1} parent=35 // pred_check_branch
          %255 = sbr.rel (%p253) target = $region40
        $region39: #{tpu_custom_call.1} parent=35 // pred_region
          %s256 = sand.u32 %s88, 1
          %s257 = sand.u32 %s88, 1
          %s258 = smul.addr %s257, 16
          %s259 = scalar_lea.vmem [#allocation5], %s258
          %s260 = smul.addr %s15, 4
          %s261 = scalar_lea.vmem %s3, %s260
          // Predicated region
          $region41: #{tpu_custom_call.1} parent=39 // pred_check
            _
          $region42: #{tpu_custom_call.1} parent=39 // pred_check_branch
            %263 = sbr.rel (0) target = $region44
          $region43: #{tpu_custom_call.1} parent=39 // pred_region
            // Predicated region
            $region45: #{tpu_custom_call.1} parent=43 // pred_check
              _
            $region46: #{tpu_custom_call.1} parent=43 // pred_check_branch
              %265 = sbr.rel target = $region48
            $region47: #{tpu_custom_call.1} parent=43 // pred_region
              // Predicated region
              $region60: #{tpu_custom_call.1} parent=47 // pred_check
                _
              $region61: #{tpu_custom_call.1} parent=47 // pred_check_branch
                %287 = sbr.rel (0) target = $region63
              $region62: #{tpu_custom_call.1} parent=47 // pred_region
                loop: start=0, step=1, limit=1
                $region64: #{tpu_custom_call.1} parent=62 // loop_pre_header
                  _
                $region65: #{tpu_custom_call.1} parent=62 // loop_header
                  %s289 = sphi 0, %s293
                  %p290 = scmp.ge.s32.totalorder %s289, 1
                  %s294 = sphi %s261, %s261
                  %s295 = sphi %s259, %s259
                $region66: #{tpu_custom_call.1} parent=62 // loop_header_branch
                  %292 = sbr.rel (%p290) target = $region70
                $region67: #{tpu_custom_call.1} parent=62 // loop_body
                  _
                $region68: #{tpu_custom_call.1} parent=62 // loop_footer
                  %s293 = sadd.s32 1, %s289
                $region69: #{tpu_custom_call.1} parent=62 // loop_footer_branch
                  %288 = sbr.rel target = $region65
                $region70: #{tpu_custom_call.1} parent=62 // loop_exit
                  _
                %s297 = ssub.s32 16, 1
                loop: start=0, step=1, limit=1
                $region71: #{tpu_custom_call.1} parent=62 // loop_pre_header
                  _
                $region72: #{tpu_custom_call.1} parent=62 // loop_header
                  %s299 = sphi 0, %s303
                  %p300 = scmp.ge.s32.totalorder %s299, 1
                  %s304 = sphi %s261, %s261
                  %s305 = sphi %s259, %s259
                $region73: #{tpu_custom_call.1} parent=62 // loop_header_branch
                  %302 = sbr.rel (%p300) target = $region77
                $region74: #{tpu_custom_call.1} parent=62 // loop_body
                  %v306 = vld [vmem:[%s304] sm:%s297]
                  %307 = vst [vmem:[%s305] sm:%s297] %v306
                  %v308 = vld [vmem:[%s304 + $0x8] sm:%s297]
                  %309 = vst [vmem:[%s305 + $0x4] sm:%s297] %v308
                  %v310 = vld [vmem:[%s304 + $0x10] sm:%s297]
                  %311 = vst [vmem:[%s305 + $0x8] sm:%s297] %v310
                  %v312 = vld [vmem:[%s304 + $0x18] sm:%s297]
                  %313 = vst [vmem:[%s305 + $0xc] sm:%s297] %v312
                $region75: #{tpu_custom_call.1} parent=62 // loop_footer
                  %s303 = sadd.s32 1, %s299
                $region76: #{tpu_custom_call.1} parent=62 // loop_footer_branch
                  %298 = sbr.rel target = $region72
                $region77: #{tpu_custom_call.1} parent=62 // loop_exit
                  _
              $region63: #{tpu_custom_call.1} parent=47 // pred_fallthru
                _
            $region48: #{tpu_custom_call.1} parent=43 // pred_fallthru
              _
            // Predicated region
            $region49: #{tpu_custom_call.1} parent=43 // pred_check
              _
            $region50: #{tpu_custom_call.1} parent=43 // pred_check_branch
              %267 = sbr.rel (0) target = $region52
            $region51: #{tpu_custom_call.1} parent=43 // pred_region
              %s269 = ssub.s32 16, 1
              loop: start=0, step=1, limit=1
              $region53: #{tpu_custom_call.1} parent=51 // loop_pre_header
                _
              $region54: #{tpu_custom_call.1} parent=51 // loop_header
                %s271 = sphi 0, %s275
                %p272 = scmp.ge.s32.totalorder %s271, 1
                %s276 = sphi %s261, %s261
                %s277 = sphi %s259, %s259
              $region55: #{tpu_custom_call.1} parent=51 // loop_header_branch
                %274 = sbr.rel (%p272) target = $region59
              $region56: #{tpu_custom_call.1} parent=51 // loop_body
                %v278 = vld [vmem:[%s276] sm:%s269]
                %279 = vst [vmem:[%s277] sm:%s269] %v278
                %v280 = vld [vmem:[%s276 + $0x8] sm:%s269]
                %281 = vst [vmem:[%s277 + $0x4] sm:%s269] %v280
                %v282 = vld [vmem:[%s276 + $0x10] sm:%s269]
                %283 = vst [vmem:[%s277 + $0x8] sm:%s269] %v282
                %v284 = vld [vmem:[%s276 + $0x18] sm:%s269]
                %285 = vst [vmem:[%s277 + $0xc] sm:%s269] %v284
              $region57: #{tpu_custom_call.1} parent=51 // loop_footer
                %s275 = sadd.s32 1, %s271
              $region58: #{tpu_custom_call.1} parent=51 // loop_footer_branch
                %270 = sbr.rel target = $region54
              $region59: #{tpu_custom_call.1} parent=51 // loop_exit
                _
            $region52: #{tpu_custom_call.1} parent=43 // pred_fallthru
              _
          $region44: #{tpu_custom_call.1} parent=39 // pred_fallthru
            _
          %314 = vnop
        $region40: #{tpu_custom_call.1} parent=35 // pred_fallthru
          _
        // Predicated region
        $region78: #{tpu_custom_call.1} parent=35 // pred_check
          %p315 = pneg %p124
        $region79: #{tpu_custom_call.1} parent=35 // pred_check_branch
          %317 = sbr.rel (%p315) target = $region81
        $region80: #{tpu_custom_call.1} parent=35 // pred_region
          %s318 = smul.u32 16, %s15
          %p319 = scmp.lt.s32.totalorder %s318, 31
          %s320 = scalar_select %p319, %s318, 31
          %s321 = smul.addr %s320, 4
          %s322 = scalar_lea.vmem %s4, %s321
          %s323 = smul.u32 16, %s15
        $region81: #{tpu_custom_call.1} parent=35 // pred_fallthru
          _
        // Predicated region
        $region82: #{tpu_custom_call.1} parent=35 // pred_check
          %p324 = pneg %p192
        $region83: #{tpu_custom_call.1} parent=35 // pred_check_branch
          %326 = sbr.rel (%p324) target = $region85
        $region84: #{tpu_custom_call.1} parent=35 // pred_region
          %p327 = scmp.lt.s32.totalorder %s15, 1
          %s328 = scalar_select %p327, %s15, 1
          %s329 = scalar_lea.vmem %s7, %s328
        $region85: #{tpu_custom_call.1} parent=35 // pred_fallthru
          _
      $region36: #{tpu_custom_call.1} parent=5 // pred_fallthru
        _
      %p330 = scmp.le.s32.totalorder 1, %s15
      %p331 = scmp.lt.s32.totalorder %s15, 3
      %p332 = pnand %p330, %p331
      %p333 = pneg %p332
      // Predicated region
      $region86: #{tpu_custom_call.1} parent=5 // pred_check
        _
      $region87: #{tpu_custom_call.1} parent=5 // pred_check_branch
        %335 = sbr.rel (%p332) target = $region89
      $region88: #{tpu_custom_call.1} parent=5 // pred_region
        %s336 = ssub.s32 %s15, 1
        %s337 = sand.u32 %s91, 1
        %s338 = sand.u32 %s91, 1
        %s339 = smul.addr %s338, 16
        %s340 = scalar_lea.vmem [#allocation5], %s339
        // Predicated region
        $region90: #{tpu_custom_call.1} parent=88 // pred_check
          %p341 = pneg %p104
        $region91: #{tpu_custom_call.1} parent=88 // pred_check_branch
          %343 = sbr.rel (%p341) target = $region93
        $region92: #{tpu_custom_call.1} parent=88 // pred_region
          _
        $region93: #{tpu_custom_call.1} parent=88 // pred_fallthru
          _
        %p344 = pneg %p36
        %p345 = pneg %p33
        %p346 = pneg %p57
        %p347 = pneg %p54
        %p348 = pneg %p78
        %p349 = pneg %p75
        %s350 = sand.u32 %s91, 1
        %s351 = sand.u32 %s91, 1
        %s352 = smul.addr %s351, 16
        %s353 = scalar_lea.vmem [#allocation5], %s352
        %p354 = pneg %p104
        %p355 = pneg %p101
        %s356 = smul.u32 16, %s20
        %p357 = scmp.lt.s32.totalorder %s356, 31
        %s358 = scalar_select %p357, %s356, 31
        %s359 = smul.addr %s358, 4
        %s360 = scalar_lea.vmem %s4, %s359
        %p361 = pneg %p130
        %p362 = pneg %p127
        %p363 = pneg %p151
        %p364 = pneg %p148
        %p365 = pneg %p172
        %p366 = pneg %p169
        %p367 = scmp.lt.s32.totalorder %s20, 1
        %s368 = scalar_select %p367, %s20, 1
        %s369 = scalar_lea.vmem %s7, %s368
        %p370 = pneg %p198
        %p371 = pneg %p195
        %p372 = pneg %p219
        %p373 = pneg %p216
        %s374 = smul.u32 16, %s20
        %p375 = scmp.lt.s32.totalorder %s374, 31
        %s376 = scalar_select %p375, %s374, 31
        %s377 = smul.addr %s376, 4
        %s378 = scalar_lea.vmem %s4, %s377
        %s379 = smul.u32 16, %s20
        %p380 = scmp.lt.s32.totalorder %s20, 1
        %s381 = scalar_select %p380, %s20, 1
        %s382 = scalar_lea.vmem %s7, %s381
        %p384 = scmp.eq.s32.totalorder %s20, 0
        // Predicated region
        $region94: #{tpu_custom_call.1} parent=88 // pred_check
          %p385 = pneg %p384
        $region95: #{tpu_custom_call.1} parent=88 // pred_check_branch
          %387 = sbr.rel (%p385) target = $region97
        $region96: #{tpu_custom_call.1} parent=88 // pred_region
          %v388 = vld [vmem:[%s0] sm:$0xff]
          %v389 = vld [vmem:[%s0 + $0x8] sm:$0xff]
          %v390 = vld [vmem:[%s5] sm:$0x3f]
          %v391 = vmul.f32 %v388, %v388
          %v392 = vmul.f32 %v389, %v389
          %vm393 = vcmask 261120
          %v394 = vsel %vm393, %v391, 0.0
          %395 = vadd.xlane.f32.xlu0 %v394
          %v396 = vpop.xlane.xlu0 %395
          %v397 = vsel %vm393, %v392, 0.0
          %398 = vadd.xlane.f32.xlu0 %v397
          %v399 = vpop.xlane.xlu0 %398
          %v400 = vrcp.pop 32.0
          %v401 = vmul.f32 32.0, %v400
          %v402 = vsub.f32 1.0, %v401
          %v403 = vmul.f32 %v400, %v402
          %v404 = vadd.f32 %v400, %v403
          %vm405 = vweird.f32 %v400
          %v406 = vsel %vm405, %v400, %v404
          %v407 = vmul.f32 %v396, %v406
          %v408 = vmul.f32 %v399, %v406
          %v409 = vsel %vm393, %v388, 0.0
          %410 = vadd.xlane.f32.xlu0 %v409
          %v411 = vpop.xlane.xlu0 %410
          %v412 = vsel %vm393, %v389, 0.0
          %413 = vadd.xlane.f32.xlu0 %v412
          %v414 = vpop.xlane.xlu0 %413
          %v415 = vmul.f32 %v411, %v406
          %v416 = vmul.f32 %v414, %v406
          %v417 = vsub.f32 %v388, %v415
          %v418 = vsub.f32 %v389, %v416
          %v419 = vadd.f32 %v407, 1e-05
          %v420 = vadd.f32 %v408, 1e-05
          %v421 = vrsqrt.pop %v419
          %v422 = vmul.f32 %v421, %v419
          %v423 = vmul.f32 %v422, %v421
          %v424 = vmul.f32 0.5, %v423
          %v425 = vsub.f32 1.5, %v424
          %v426 = vmul.f32 %v421, %v425
          %vm427 = vweird.f32 %v419
          %vm428 = vweird.f32 %v421
          %vm429 = vmor %vm427, %vm428
          %v430 = vsel %vm429, %v421, %v426
          %v431 = vrsqrt.pop %v420
          %v432 = vmul.f32 %v431, %v420
          %v433 = vmul.f32 %v432, %v431
          %v434 = vmul.f32 0.5, %v433
          %v435 = vsub.f32 1.5, %v434
          %v436 = vmul.f32 %v431, %v435
          %vm437 = vweird.f32 %v420
          %vm438 = vweird.f32 %v431
          %vm439 = vmor %vm437, %vm438
          %v440 = vsel %vm439, %v431, %v436
          %v441 = vmul.f32 %v417, %v430
          %v442 = vmul.f32 %v418, %v440
          %v443 = vperm.slane %v390, 0
          %v444 = vmul.f32 %v441, %v443
          %v445 = vmul.f32 %v442, %v443
          %v446 = vperm.slane %v390, 1
          %v447 = vadd.f32 %v444, %v446
          %v448 = vadd.f32 %v445, %v446
          %v449 = vpack.c.bf16 %v448, %v447
          %v450 = vld [vmem:[%s1] sm:$0xf]
          %v451 = vld [vmem:[%s1 + $0x4] sm:$0xf]
          %v452 = vld [vmem:[%s1 + $0x8] sm:$0xf]
          %v453 = vld [vmem:[%s1 + $0xc] sm:$0xf]
          %v454 = vld [vmem:[%s6] sm:$0x1]
          %v456 = vperm.slane %v454, 0
          %v462 = vunpack.c.l.b16 %v450
          %v463 = vunpack.c.l.b16 %v451
          %v464 = vunpack.c.l.b16 %v452
          %v465 = vunpack.c.l.b16 %v453
          %v466 = vpack.c.b16 %v463, %v462
          %v467 = vpack.c.b16 %v465, %v464
          %v471 = vsel %vm393, %v449, 0
          %473 = vmatpush.bf16.msra.mxu0 0
          %474 = vmatpush.bf16.msra.mxu0 0
          %475 = vmatpush.bf16.msra.mxu0 0
          %476 = vmatpush.bf16.msra.mxu0 0
          %477 = vmatpush.bf16.msra.mxu0 0
          %478 = vmatpush.bf16.msra.mxu0 0
          %479 = vmatpush.bf16.msra.mxu0 %v467
          %480 = vmatpush.bf16.msra.mxu0 %v466
          %481 = vmatmul.bf16.gmra.mxu0 %v471
          %v482 = vpop.f32.mrf.mxu0
          %v483 = vadd.f32 %v456, %v482
          %v484 = vpop.f32.mrf.mxu0
          %v485 = vadd.f32 %v456, %v484
          %486 = vdwg.mxu0
          %489 = vrot.lane.b32.xlu0 %v483, 120
          %v490 = vpop.permute.xlu0 %489
          %491 = vrot.lane.b32.xlu0 %v485, 120
          %v492 = vpop.permute.xlu0 %491
          %495 = vrot.lane.b32.xlu0 %v483, 112
          %v496 = vpop.permute.xlu0 %495
          %497 = vrot.lane.b32.xlu0 %v485, 112
          %v498 = vpop.permute.xlu0 %497
          %501 = vrot.lane.b32.xlu0 %v483, 104
          %v502 = vpop.permute.xlu0 %501
          %503 = vrot.lane.b32.xlu0 %v485, 104
          %v504 = vpop.permute.xlu0 %503
          %v507 = vpack.c.bf16 %v483, %v483
          %v508 = vpack.c.bf16 %v485, %v485
          %v509 = vpack.c.bf16 %v490, %v490
          %v510 = vpack.c.bf16 %v492, %v492
          %v511 = vpack.c.bf16 %v496, %v496
          %v512 = vpack.c.bf16 %v498, %v498
          %v513 = vpack.c.bf16 %v502, %v502
          %v514 = vpack.c.bf16 %v504, %v504
          %v516 = vunpack.c.l.b16 %v507
          %v517 = vpack.c.b16 %v516, %v516
          %518 = vrot.lane.b32.xlu0 %v517, 96
          %v519 = vpop.permute.xlu0 %518
          %vm520 = vcmask 64512
          %v522 = vsel %vm520, %v507, 0
          %v525 = vsel %vm520, %v519, 0
          %527 = vmatpush.bf16.xpose.msra.mxu0 0
          %528 = vmatpush.bf16.xpose.msra.mxu0 0
          %529 = vmatpush.bf16.xpose.msra.mxu0 0
          %530 = vmatpush.bf16.xpose.msra.mxu0 0
          %531 = vmatpush.bf16.xpose.msra.mxu0 0
          %532 = vmatpush.bf16.xpose.msra.mxu0 0
          %533 = vmatpush.bf16.xpose.msra.mxu0 0
          %534 = vmatpush.bf16.xpose.msra.mxu0 %v525
          %535 = vmatmul.bf16.gmra.mxu0 %v522
          %v536 = vpop.f32.mrf.mxu0
          %v537 = vadd.f32 0.0, %v536
          %v538 = vpop.f32.mrf.mxu0
          %539 = vdwg.mxu0
          %v541 = vunpack.c.l.b16 %v508
          %v542 = vpack.c.b16 %v541, %v541
          %543 = vrot.lane.b32.xlu0 %v542, 96
          %v544 = vpop.permute.xlu0 %543
          %v546 = vsel %vm520, %v508, 0
          %v549 = vsel %vm520, %v544, 0
          %551 = vmatpush.bf16.xpose.msra.mxu0 0
          %552 = vmatpush.bf16.xpose.msra.mxu0 0
          %553 = vmatpush.bf16.xpose.msra.mxu0 0
          %554 = vmatpush.bf16.xpose.msra.mxu0 0
          %555 = vmatpush.bf16.xpose.msra.mxu0 0
          %556 = vmatpush.bf16.xpose.msra.mxu0 0
          %557 = vmatpush.bf16.xpose.msra.mxu0 0
          %558 = vmatpush.bf16.xpose.msra.mxu0 %v549
          %559 = vmatmul.bf16.gmra.mxu0 %v546
          %v560 = vpop.f32.mrf.mxu0
          %v561 = vadd.f32 0.0, %v560
          %v562 = vpop.f32.mrf.mxu0
          %563 = vdwg.mxu0
          %v565 = vunpack.c.l.b16 %v509
          %v566 = vpack.c.b16 %v565, %v565
          %567 = vrot.lane.b32.xlu0 %v566, 96
          %v568 = vpop.permute.xlu0 %567
          %v570 = vsel %vm520, %v509, 0
          %v573 = vsel %vm520, %v568, 0
          %575 = vmatpush.bf16.xpose.msra.mxu0 0
          %576 = vmatpush.bf16.xpose.msra.mxu0 0
          %577 = vmatpush.bf16.xpose.msra.mxu0 0
          %578 = vmatpush.bf16.xpose.msra.mxu0 0
          %579 = vmatpush.bf16.xpose.msra.mxu0 0
          %580 = vmatpush.bf16.xpose.msra.mxu0 0
          %581 = vmatpush.bf16.xpose.msra.mxu0 0
          %582 = vmatpush.bf16.xpose.msra.mxu0 %v573
          %583 = vmatmul.bf16.gmra.mxu0 %v570
          %v584 = vpop.f32.mrf.mxu0
          %v585 = vadd.f32 0.0, %v584
          %v586 = vpop.f32.mrf.mxu0
          %587 = vdwg.mxu0
          %v589 = vunpack.c.l.b16 %v510
          %v590 = vpack.c.b16 %v589, %v589
          %591 = vrot.lane.b32.xlu0 %v590, 96
          %v592 = vpop.permute.xlu0 %591
          %v594 = vsel %vm520, %v510, 0
          %v597 = vsel %vm520, %v592, 0
          %599 = vmatpush.bf16.xpose.msra.mxu0 0
          %600 = vmatpush.bf16.xpose.msra.mxu0 0
          %601 = vmatpush.bf16.xpose.msra.mxu0 0
          %602 = vmatpush.bf16.xpose.msra.mxu0 0
          %603 = vmatpush.bf16.xpose.msra.mxu0 0
          %604 = vmatpush.bf16.xpose.msra.mxu0 0
          %605 = vmatpush.bf16.xpose.msra.mxu0 0
          %606 = vmatpush.bf16.xpose.msra.mxu0 %v597
          %607 = vmatmul.bf16.gmra.mxu0 %v594
          %v608 = vpop.f32.mrf.mxu0
          %v609 = vadd.f32 0.0, %v608
          %v610 = vpop.f32.mrf.mxu0
          %611 = vdwg.mxu0
          %v613 = vunpack.c.l.b16 %v511
          %v614 = vpack.c.b16 %v613, %v613
          %615 = vrot.lane.b32.xlu0 %v614, 96
          %v616 = vpop.permute.xlu0 %615
          %v618 = vsel %vm520, %v511, 0
          %v621 = vsel %vm520, %v616, 0
          %623 = vmatpush.bf16.xpose.msra.mxu0 0
          %624 = vmatpush.bf16.xpose.msra.mxu0 0
          %625 = vmatpush.bf16.xpose.msra.mxu0 0
          %626 = vmatpush.bf16.xpose.msra.mxu0 0
          %627 = vmatpush.bf16.xpose.msra.mxu0 0
          %628 = vmatpush.bf16.xpose.msra.mxu0 0
          %629 = vmatpush.bf16.xpose.msra.mxu0 0
          %630 = vmatpush.bf16.xpose.msra.mxu0 %v621
          %631 = vmatmul.bf16.gmra.mxu0 %v618
          %v632 = vpop.f32.mrf.mxu0
          %v633 = vadd.f32 0.0, %v632
          %v634 = vpop.f32.mrf.mxu0
          %635 = vdwg.mxu0
          %v637 = vunpack.c.l.b16 %v512
          %v638 = vpack.c.b16 %v637, %v637
          %639 = vrot.lane.b32.xlu0 %v638, 96
          %v640 = vpop.permute.xlu0 %639
          %v642 = vsel %vm520, %v512, 0
          %v645 = vsel %vm520, %v640, 0
          %647 = vmatpush.bf16.xpose.msra.mxu0 0
          %648 = vmatpush.bf16.xpose.msra.mxu0 0
          %649 = vmatpush.bf16.xpose.msra.mxu0 0
          %650 = vmatpush.bf16.xpose.msra.mxu0 0
          %651 = vmatpush.bf16.xpose.msra.mxu0 0
          %652 = vmatpush.bf16.xpose.msra.mxu0 0
          %653 = vmatpush.bf16.xpose.msra.mxu0 0
          %654 = vmatpush.bf16.xpose.msra.mxu0 %v645
          %655 = vmatmul.bf16.gmra.mxu0 %v642
          %v656 = vpop.f32.mrf.mxu0
          %v657 = vadd.f32 0.0, %v656
          %v658 = vpop.f32.mrf.mxu0
          %659 = vdwg.mxu0
          %v661 = vunpack.c.l.b16 %v513
          %v662 = vpack.c.b16 %v661, %v661
          %663 = vrot.lane.b32.xlu0 %v662, 96
          %v664 = vpop.permute.xlu0 %663
          %v666 = vsel %vm520, %v513, 0
          %v669 = vsel %vm520, %v664, 0
          %671 = vmatpush.bf16.xpose.msra.mxu0 0
          %672 = vmatpush.bf16.xpose.msra.mxu0 0
          %673 = vmatpush.bf16.xpose.msra.mxu0 0
          %674 = vmatpush.bf16.xpose.msra.mxu0 0
          %675 = vmatpush.bf16.xpose.msra.mxu0 0
          %676 = vmatpush.bf16.xpose.msra.mxu0 0
          %677 = vmatpush.bf16.xpose.msra.mxu0 0
          %678 = vmatpush.bf16.xpose.msra.mxu0 %v669
          %679 = vmatmul.bf16.gmra.mxu0 %v666
          %v680 = vpop.f32.mrf.mxu0
          %v681 = vadd.f32 0.0, %v680
          %v682 = vpop.f32.mrf.mxu0
          %683 = vdwg.mxu0
          %v685 = vunpack.c.l.b16 %v514
          %v686 = vpack.c.b16 %v685, %v685
          %687 = vrot.lane.b32.xlu0 %v686, 96
          %v688 = vpop.permute.xlu0 %687
          %v690 = vsel %vm520, %v514, 0
          %v693 = vsel %vm520, %v688, 0
          %695 = vmatpush.bf16.xpose.msra.mxu0 0
          %696 = vmatpush.bf16.xpose.msra.mxu0 0
          %697 = vmatpush.bf16.xpose.msra.mxu0 0
          %698 = vmatpush.bf16.xpose.msra.mxu0 0
          %699 = vmatpush.bf16.xpose.msra.mxu0 0
          %700 = vmatpush.bf16.xpose.msra.mxu0 0
          %701 = vmatpush.bf16.xpose.msra.mxu0 0
          %702 = vmatpush.bf16.xpose.msra.mxu0 %v693
          %703 = vmatmul.bf16.gmra.mxu0 %v690
          %v704 = vpop.f32.mrf.mxu0
          %v705 = vadd.f32 0.0, %v704
          %v706 = vpop.f32.mrf.mxu0
          %707 = vdwg.mxu0
          %v708 = vsel %vm520, %v537, -inf
          %709 = vmax.xlane.f32.xlu0 %v708
          %v710 = vpop.xlane.xlu0 %709
          %v711 = vsel %vm520, %v561, -inf
          %712 = vmax.xlane.f32.xlu0 %v711
          %v713 = vpop.xlane.xlu0 %712
          %v714 = vsel %vm520, %v585, -inf
          %715 = vmax.xlane.f32.xlu0 %v714
          %v716 = vpop.xlane.xlu0 %715
          %v717 = vsel %vm520, %v609, -inf
          %718 = vmax.xlane.f32.xlu0 %v717
          %v719 = vpop.xlane.xlu0 %718
          %v720 = vsel %vm520, %v633, -inf
          %721 = vmax.xlane.f32.xlu0 %v720
          %v722 = vpop.xlane.xlu0 %721
          %v723 = vsel %vm520, %v657, -inf
          %724 = vmax.xlane.f32.xlu0 %v723
          %v725 = vpop.xlane.xlu0 %724
          %v726 = vsel %vm520, %v681, -inf
          %727 = vmax.xlane.f32.xlu0 %v726
          %v728 = vpop.xlane.xlu0 %727
          %v729 = vsel %vm520, %v705, -inf
          %730 = vmax.xlane.f32.xlu0 %v729
          %v731 = vpop.xlane.xlu0 %730
          %v732 = vsub.f32 %v537, %v710
          %v733 = vsub.f32 %v561, %v713
          %v734 = vsub.f32 %v585, %v716
          %v735 = vsub.f32 %v609, %v719
          %v736 = vsub.f32 %v633, %v722
          %v737 = vsub.f32 %v657, %v725
          %v738 = vsub.f32 %v681, %v728
          %v739 = vsub.f32 %v705, %v731
          %v740 = vmul.f32 %v732, 1.442695
          %v741 = vpow.pop %v740
          %v742 = vmul.f32 %v733, 1.442695
          %v743 = vpow.pop %v742
          %v744 = vmul.f32 %v734, 1.442695
          %v745 = vpow.pop %v744
          %v746 = vmul.f32 %v735, 1.442695
          %v747 = vpow.pop %v746
          %v748 = vmul.f32 %v736, 1.442695
          %v749 = vpow.pop %v748
          %v750 = vmul.f32 %v737, 1.442695
          %v751 = vpow.pop %v750
          %v752 = vmul.f32 %v738, 1.442695
          %v753 = vpow.pop %v752
          %v754 = vmul.f32 %v739, 1.442695
          %v755 = vpow.pop %v754
          %v756 = vsel %vm520, %v741, 0.0
          %757 = vadd.xlane.f32.xlu0 %v756
          %v758 = vpop.xlane.xlu0 %757
          %v759 = vsel %vm520, %v743, 0.0
          %760 = vadd.xlane.f32.xlu0 %v759
          %v761 = vpop.xlane.xlu0 %760
          %v762 = vsel %vm520, %v745, 0.0
          %763 = vadd.xlane.f32.xlu0 %v762
          %v764 = vpop.xlane.xlu0 %763
          %v765 = vsel %vm520, %v747, 0.0
          %766 = vadd.xlane.f32.xlu0 %v765
          %v767 = vpop.xlane.xlu0 %766
          %v768 = vsel %vm520, %v749, 0.0
          %769 = vadd.xlane.f32.xlu0 %v768
          %v770 = vpop.xlane.xlu0 %769
          %v771 = vsel %vm520, %v751, 0.0
          %772 = vadd.xlane.f32.xlu0 %v771
          %v773 = vpop.xlane.xlu0 %772
          %v774 = vsel %vm520, %v753, 0.0
          %775 = vadd.xlane.f32.xlu0 %v774
          %v776 = vpop.xlane.xlu0 %775
          %v777 = vsel %vm520, %v755, 0.0
          %778 = vadd.xlane.f32.xlu0 %v777
          %v779 = vpop.xlane.xlu0 %778
          %v780 = vrcp.pop %v758
          %v781 = vrcp.pop %v761
          %v782 = vrcp.pop %v764
          %v783 = vrcp.pop %v767
          %v784 = vrcp.pop %v770
          %v785 = vrcp.pop %v773
          %v786 = vrcp.pop %v776
          %v787 = vrcp.pop %v779
          %v788 = vmul.f32 %v741, %v780
          %v789 = vmul.f32 %v743, %v781
          %v790 = vmul.f32 %v745, %v782
          %v791 = vmul.f32 %v747, %v783
          %v792 = vmul.f32 %v749, %v784
          %v793 = vmul.f32 %v751, %v785
          %v794 = vmul.f32 %v753, %v786
          %v795 = vmul.f32 %v755, %v787
          %v796 = vpack.c.bf16 %v788, %v788
          %v797 = vpack.c.bf16 %v789, %v789
          %v798 = vpack.c.bf16 %v790, %v790
          %v799 = vpack.c.bf16 %v791, %v791
          %v800 = vpack.c.bf16 %v792, %v792
          %v801 = vpack.c.bf16 %v793, %v793
          %v802 = vpack.c.bf16 %v794, %v794
          %v803 = vpack.c.bf16 %v795, %v795
          %804 = vrot.lane.b32.xlu0 %v517, 64
          %v805 = vpop.permute.xlu0 %804
          %v807 = vsel %vm520, %v796, 0
          %vm809 = vcmask 1043456
          %v811 = vsel %vm809, %v805, 0
          %813 = vmatpush.bf16.msra.mxu0 0
          %814 = vmatpush.bf16.msra.mxu0 0
          %815 = vmatpush.bf16.msra.mxu0 0
          %816 = vmatpush.bf16.msra.mxu0 0
          %817 = vmatpush.bf16.msra.mxu0 0
          %818 = vmatpush.bf16.msra.mxu0 0
          %819 = vmatpush.bf16.msra.mxu0 0
          %820 = vmatpush.bf16.msra.mxu0 %v811
          %821 = vmatmul.bf16.gmra.mxu0 %v807
          %v822 = vpop.f32.mrf.mxu0
          %v823 = vadd.f32 0.0, %v822
          %v824 = vpop.f32.mrf.mxu0
          %825 = vdwg.mxu0
          %826 = vrot.lane.b32.xlu0 %v542, 64
          %v827 = vpop.permute.xlu0 %826
          %v829 = vsel %vm520, %v797, 0
          %v832 = vsel %vm809, %v827, 0
          %834 = vmatpush.bf16.msra.mxu0 0
          %835 = vmatpush.bf16.msra.mxu0 0
          %836 = vmatpush.bf16.msra.mxu0 0
          %837 = vmatpush.bf16.msra.mxu0 0
          %838 = vmatpush.bf16.msra.mxu0 0
          %839 = vmatpush.bf16.msra.mxu0 0
          %840 = vmatpush.bf16.msra.mxu0 0
          %841 = vmatpush.bf16.msra.mxu0 %v832
          %842 = vmatmul.bf16.gmra.mxu0 %v829
          %v843 = vpop.f32.mrf.mxu0
          %v844 = vadd.f32 0.0, %v843
          %v845 = vpop.f32.mrf.mxu0
          %846 = vdwg.mxu0
          %847 = vrot.lane.b32.xlu0 %v566, 64
          %v848 = vpop.permute.xlu0 %847
          %v850 = vsel %vm520, %v798, 0
          %v853 = vsel %vm809, %v848, 0
          %855 = vmatpush.bf16.msra.mxu0 0
          %856 = vmatpush.bf16.msra.mxu0 0
          %857 = vmatpush.bf16.msra.mxu0 0
          %858 = vmatpush.bf16.msra.mxu0 0
          %859 = vmatpush.bf16.msra.mxu0 0
          %860 = vmatpush.bf16.msra.mxu0 0
          %861 = vmatpush.bf16.msra.mxu0 0
          %862 = vmatpush.bf16.msra.mxu0 %v853
          %863 = vmatmul.bf16.gmra.mxu0 %v850
          %v864 = vpop.f32.mrf.mxu0
          %v865 = vadd.f32 0.0, %v864
          %v866 = vpop.f32.mrf.mxu0
          %867 = vdwg.mxu0
          %868 = vrot.lane.b32.xlu0 %v590, 64
          %v869 = vpop.permute.xlu0 %868
          %v871 = vsel %vm520, %v799, 0
          %v874 = vsel %vm809, %v869, 0
          %876 = vmatpush.bf16.msra.mxu0 0
          %877 = vmatpush.bf16.msra.mxu0 0
          %878 = vmatpush.bf16.msra.mxu0 0
          %879 = vmatpush.bf16.msra.mxu0 0
          %880 = vmatpush.bf16.msra.mxu0 0
          %881 = vmatpush.bf16.msra.mxu0 0
          %882 = vmatpush.bf16.msra.mxu0 0
          %883 = vmatpush.bf16.msra.mxu0 %v874
          %884 = vmatmul.bf16.gmra.mxu0 %v871
          %v885 = vpop.f32.mrf.mxu0
          %v886 = vadd.f32 0.0, %v885
          %v887 = vpop.f32.mrf.mxu0
          %888 = vdwg.mxu0
          %889 = vrot.lane.b32.xlu0 %v614, 64
          %v890 = vpop.permute.xlu0 %889
          %v892 = vsel %vm520, %v800, 0
          %v895 = vsel %vm809, %v890, 0
          %897 = vmatpush.bf16.msra.mxu0 0
          %898 = vmatpush.bf16.msra.mxu0 0
          %899 = vmatpush.bf16.msra.mxu0 0
          %900 = vmatpush.bf16.msra.mxu0 0
          %901 = vmatpush.bf16.msra.mxu0 0
          %902 = vmatpush.bf16.msra.mxu0 0
          %903 = vmatpush.bf16.msra.mxu0 0
          %904 = vmatpush.bf16.msra.mxu0 %v895
          %905 = vmatmul.bf16.gmra.mxu0 %v892
          %v906 = vpop.f32.mrf.mxu0
          %v907 = vadd.f32 0.0, %v906
          %v908 = vpop.f32.mrf.mxu0
          %909 = vdwg.mxu0
          %910 = vrot.lane.b32.xlu0 %v638, 64
          %v911 = vpop.permute.xlu0 %910
          %v913 = vsel %vm520, %v801, 0
          %v916 = vsel %vm809, %v911, 0
          %918 = vmatpush.bf16.msra.mxu0 0
          %919 = vmatpush.bf16.msra.mxu0 0
          %920 = vmatpush.bf16.msra.mxu0 0
          %921 = vmatpush.bf16.msra.mxu0 0
          %922 = vmatpush.bf16.msra.mxu0 0
          %923 = vmatpush.bf16.msra.mxu0 0
          %924 = vmatpush.bf16.msra.mxu0 0
          %925 = vmatpush.bf16.msra.mxu0 %v916
          %926 = vmatmul.bf16.gmra.mxu0 %v913
          %v927 = vpop.f32.mrf.mxu0
          %v928 = vadd.f32 0.0, %v927
          %v929 = vpop.f32.mrf.mxu0
          %930 = vdwg.mxu0
          %931 = vrot.lane.b32.xlu0 %v662, 64
          %v932 = vpop.permute.xlu0 %931
          %v934 = vsel %vm520, %v802, 0
          %v937 = vsel %vm809, %v932, 0
          %939 = vmatpush.bf16.msra.mxu0 0
          %940 = vmatpush.bf16.msra.mxu0 0
          %941 = vmatpush.bf16.msra.mxu0 0
          %942 = vmatpush.bf16.msra.mxu0 0
          %943 = vmatpush.bf16.msra.mxu0 0
          %944 = vmatpush.bf16.msra.mxu0 0
          %945 = vmatpush.bf16.msra.mxu0 0
          %946 = vmatpush.bf16.msra.mxu0 %v937
          %947 = vmatmul.bf16.gmra.mxu0 %v934
          %v948 = vpop.f32.mrf.mxu0
          %v949 = vadd.f32 0.0, %v948
          %v950 = vpop.f32.mrf.mxu0
          %951 = vdwg.mxu0
          %952 = vrot.lane.b32.xlu0 %v686, 64
          %v953 = vpop.permute.xlu0 %952
          %v955 = vsel %vm520, %v803, 0
          %v958 = vsel %vm809, %v953, 0
          %960 = vmatpush.bf16.msra.mxu0 0
          %961 = vmatpush.bf16.msra.mxu0 0
          %962 = vmatpush.bf16.msra.mxu0 0
          %963 = vmatpush.bf16.msra.mxu0 0
          %964 = vmatpush.bf16.msra.mxu0 0
          %965 = vmatpush.bf16.msra.mxu0 0
          %966 = vmatpush.bf16.msra.mxu0 0
          %967 = vmatpush.bf16.msra.mxu0 %v958
          %968 = vmatmul.bf16.gmra.mxu0 %v955
          %v969 = vpop.f32.mrf.mxu0
          %v970 = vadd.f32 0.0, %v969
          %v971 = vpop.f32.mrf.mxu0
          %972 = vdwg.mxu0
          %975 = vrot.lane.b32.xlu0 %v865, 8
          %v976 = vpop.permute.xlu0 %975
          %977 = vrot.lane.b32.xlu0 %v886, 8
          %v978 = vpop.permute.xlu0 %977
          %983 = vrot.lane.b32.xlu0 %v907, 16
          %v984 = vpop.permute.xlu0 %983
          %985 = vrot.lane.b32.xlu0 %v928, 16
          %v986 = vpop.permute.xlu0 %985
          %991 = vrot.lane.b32.xlu0 %v949, 24
          %v992 = vpop.permute.xlu0 %991
          %993 = vrot.lane.b32.xlu0 %v970, 24
          %v994 = vpop.permute.xlu0 %993
          %v997 = vsel %vm520, %v823, %v976
          %v998 = vsel %vm520, %v844, %v978
          %vm999 = vcmask 130048
          %v1000 = vsel %vm999, %v997, %v984
          %v1001 = vsel %vm999, %v998, %v986
          %vm1002 = vcmask 195584
          %v1003 = vsel %vm1002, %v1000, %v992
          %v1004 = vsel %vm1002, %v1001, %v994
          %v1005 = vpack.c.bf16 %v1004, %v1003
          %v1006 = vld [vmem:[%s2] sm:$0xf]
          %v1007 = vld [vmem:[%s2 + $0x4] sm:$0xf]
          %v1008 = vld [vmem:[%s2 + $0x8] sm:$0xf]
          %v1009 = vld [vmem:[%s2 + $0xc] sm:$0xf]
          %v1010 = vperm.slane %v390, 4
          %v1015 = vunpack.c.l.b16 %v1006
          %v1016 = vunpack.c.l.b16 %v1007
          %v1017 = vunpack.c.l.b16 %v1008
          %v1018 = vunpack.c.l.b16 %v1009
          %v1019 = vpack.c.b16 %v1016, %v1015
          %v1020 = vpack.c.b16 %v1018, %v1017
          %v1024 = vsel %vm393, %v1005, 0
          %1026 = vmatpush.bf16.msra.mxu0 0
          %1027 = vmatpush.bf16.msra.mxu0 0
          %1028 = vmatpush.bf16.msra.mxu0 0
          %1029 = vmatpush.bf16.msra.mxu0 0
          %1030 = vmatpush.bf16.msra.mxu0 0
          %1031 = vmatpush.bf16.msra.mxu0 0
          %1032 = vmatpush.bf16.msra.mxu0 %v1020
          %1033 = vmatpush.bf16.msra.mxu0 %v1019
          %1034 = vmatmul.bf16.gmra.mxu0 %v1024
          %v1035 = vpop.f32.mrf.mxu0
          %v1036 = vadd.f32 %v1010, %v1035
          %v1037 = vpop.f32.mrf.mxu0
          %v1038 = vadd.f32 %v1010, %v1037
          %1039 = vdwg.mxu0
          %v1040 = vadd.f32 %v1036, %v388
          %v1041 = vadd.f32 %v1038, %v389
          %1042 = vst.msk [vmem:[#allocation2] sm:$0xff] %vm393, %v1040
          %1043 = vst.msk [vmem:[#allocation2 + $0x8] sm:$0xff] %vm393, %v1041
          %v1044 = vmul.f32 %v1040, %v1040
          %v1045 = vmul.f32 %v1041, %v1041
          %v1046 = vsel %vm393, %v1044, 0.0
          %1047 = vadd.xlane.f32.xlu0 %v1046
          %v1048 = vpop.xlane.xlu0 %1047
          %v1049 = vsel %vm393, %v1045, 0.0
          %1050 = vadd.xlane.f32.xlu0 %v1049
          %v1051 = vpop.xlane.xlu0 %1050
          %v1052 = vmul.f32 %v1048, %v406
          %v1053 = vmul.f32 %v1051, %v406
          %v1054 = vsel %vm393, %v1040, 0.0
          %1055 = vadd.xlane.f32.xlu0 %v1054
          %v1056 = vpop.xlane.xlu0 %1055
          %v1057 = vsel %vm393, %v1041, 0.0
          %1058 = vadd.xlane.f32.xlu0 %v1057
          %v1059 = vpop.xlane.xlu0 %1058
          %v1060 = vmul.f32 %v1056, %v406
          %v1061 = vmul.f32 %v1059, %v406
          %v1062 = vsub.f32 %v1040, %v1060
          %v1063 = vsub.f32 %v1041, %v1061
          %v1064 = vadd.f32 %v1052, 1e-05
          %v1065 = vadd.f32 %v1053, 1e-05
          %v1066 = vrsqrt.pop %v1064
          %v1067 = vmul.f32 %v1066, %v1064
          %v1068 = vmul.f32 %v1067, %v1066
          %v1069 = vmul.f32 0.5, %v1068
          %v1070 = vsub.f32 1.5, %v1069
          %v1071 = vmul.f32 %v1066, %v1070
          %vm1072 = vweird.f32 %v1064
          %vm1073 = vweird.f32 %v1066
          %vm1074 = vmor %vm1072, %vm1073
          %v1075 = vsel %vm1074, %v1066, %v1071
          %v1076 = vrsqrt.pop %v1065
          %v1077 = vmul.f32 %v1076, %v1065
          %v1078 = vmul.f32 %v1077, %v1076
          %v1079 = vmul.f32 0.5, %v1078
          %v1080 = vsub.f32 1.5, %v1079
          %v1081 = vmul.f32 %v1076, %v1080
          %vm1082 = vweird.f32 %v1065
          %vm1083 = vweird.f32 %v1076
          %vm1084 = vmor %vm1082, %vm1083
          %v1085 = vsel %vm1084, %v1076, %v1081
          %v1086 = vmul.f32 %v1062, %v1075
          %v1087 = vmul.f32 %v1063, %v1085
          %v1088 = vperm.slane %v390, 2
          %v1089 = vmul.f32 %v1086, %v1088
          %v1090 = vmul.f32 %v1087, %v1088
          %v1091 = vperm.slane %v390, 3
          %v1092 = vadd.f32 %v1089, %v1091
          %v1093 = vadd.f32 %v1090, %v1091
          %v1094 = vpack.c.bf16 %v1092, %v1092
          %v1095 = vpack.c.bf16 %v1093, %v1093
          %vm1096 = vcmask 257024
          %1097 = vst.msk [vmem:[#allocation3] sm:$0xf] %vm1096, %v1094
          %1098 = vst.msk [vmem:[#allocation3 + $0x4] sm:$0xf] %vm1096, %v1095
          %1099 = vst.msk [vmem:[#allocation4] sm:$0xff] %vm393, 0.0
          %1100 = vst.msk [vmem:[#allocation4 + $0x8] sm:$0xff] %vm393, 0.0
        $region97: #{tpu_custom_call.1} parent=88 // pred_fallthru
          _
        %v1101 = vld [vmem:[#allocation3] sm:$0xf]
        %v1102 = vld [vmem:[#allocation3 + $0x4] sm:$0xf]
        %v1103 = vld [vmem:[%s340] sm:$0xf]
        %v1104 = vld [vmem:[%s340 + $0x4] sm:$0xf]
        %v1105 = vld [vmem:[%s340 + $0x8] sm:$0xf]
        %v1106 = vld [vmem:[%s340 + $0xc] sm:$0xf]
        %v1107 = vld [vmem:[%s382] sm:$0x1]
        %v1109 = vperm.slane %v1107, 0
        %v1113 = vunpack.c.l.b16 %v1101
        %v1114 = vunpack.c.l.b16 %v1102
        %v1115 = vpack.c.b16 %v1114, %v1113
        %v1120 = vunpack.c.l.b16 %v1103
        %v1121 = vunpack.c.l.b16 %v1104
        %v1122 = vunpack.c.l.b16 %v1105
        %v1123 = vunpack.c.l.b16 %v1106
        %v1124 = vpack.c.b16 %v1121, %v1120
        %v1125 = vpack.c.b16 %v1123, %v1122
        %vm1128 = vcmask 261120
        %v1130 = vsel %vm1128, %v1115, 0
        %1132 = vmatpush.bf16.msra.mxu0 0
        %1133 = vmatpush.bf16.msra.mxu0 0
        %1134 = vmatpush.bf16.msra.mxu0 0
        %1135 = vmatpush.bf16.msra.mxu0 0
        %1136 = vmatpush.bf16.msra.mxu0 0
        %1137 = vmatpush.bf16.msra.mxu0 0
        %1138 = vmatpush.bf16.msra.mxu0 %v1125
        %1139 = vmatpush.bf16.msra.mxu0 %v1124
        %1140 = vmatmul.bf16.gmra.mxu0 %v1130
        %v1141 = vpop.f32.mrf.mxu0
        %v1142 = vadd.f32 %v1109, %v1141
        %v1143 = vpop.f32.mrf.mxu0
        %v1144 = vadd.f32 %v1109, %v1143
        %1145 = vdwg.mxu0
        %v1146 = vmul.f32 %v1142, 0.5
        %v1147 = vmul.f32 %v1144, 0.5
        %v1148 = vmul.f32 %v1142, 0.044715
        %v1149 = vmul.f32 %v1144, 0.044715
        %v1150 = vmul.f32 %v1148, %v1142
        %v1151 = vmul.f32 %v1149, %v1144
        %v1152 = vmul.f32 %v1150, %v1142
        %v1153 = vmul.f32 %v1151, %v1144
        %v1154 = vadd.f32 %v1142, %v1152
        %v1155 = vadd.f32 %v1144, %v1153
        %v1156 = vmul.f32 %v1154, 0.7978846
        %v1157 = vmul.f32 %v1155, 0.7978846
        %v1158 = vtanh.pop %v1156
        %v1159 = vtanh.pop %v1157
        %v1160 = vadd.f32 %v1158, 1.0
        %v1161 = vadd.f32 %v1159, 1.0
        %v1162 = vmul.f32 %v1146, %v1160
        %v1163 = vmul.f32 %v1147, %v1161
        %v1164 = vld [vmem:[#allocation4] sm:$0xff]
        %v1165 = vld [vmem:[#allocation4 + $0x8] sm:$0xff]
        %v1166 = vpack.c.bf16 %v1163, %v1162
        %v1167 = vld [vmem:[%s378] sm:$0xf]
        %v1168 = vld [vmem:[%s378 + $0x4] sm:$0xf]
        %v1169 = vld [vmem:[%s378 + $0x8] sm:$0xf]
        %v1170 = vld [vmem:[%s378 + $0xc] sm:$0xf]
        %v1171 = vld [vmem:[%s378 + $0x10] sm:$0xf]
        %v1172 = vld [vmem:[%s378 + $0x14] sm:$0xf]
        %v1173 = vld [vmem:[%s378 + $0x18] sm:$0xf]
        %v1174 = vld [vmem:[%s378 + $0x1c] sm:$0xf]
        %v1175 = vld [vmem:[%s378 + $0x20] sm:$0xf]
        %v1176 = vld [vmem:[%s378 + $0x24] sm:$0xf]
        %v1177 = vld [vmem:[%s378 + $0x28] sm:$0xf]
        %v1178 = vld [vmem:[%s378 + $0x2c] sm:$0xf]
        %v1179 = vld [vmem:[%s378 + $0x30] sm:$0xf]
        %v1180 = vld [vmem:[%s378 + $0x34] sm:$0xf]
        %v1181 = vld [vmem:[%s378 + $0x38] sm:$0xf]
        %v1182 = vld [vmem:[%s378 + $0x3c] sm:$0xf]
        %v1199 = vunpack.c.l.b16 %v1167
        %v1200 = vunpack.c.l.b16 %v1168
        %v1201 = vunpack.c.l.b16 %v1169
        %v1202 = vunpack.c.l.b16 %v1170
        %v1203 = vunpack.c.l.b16 %v1171
        %v1204 = vunpack.c.l.b16 %v1172
        %v1205 = vunpack.c.l.b16 %v1173
        %v1206 = vunpack.c.l.b16 %v1174
        %v1207 = vunpack.c.l.b16 %v1175
        %v1208 = vunpack.c.l.b16 %v1176
        %v1209 = vunpack.c.l.b16 %v1177
        %v1210 = vunpack.c.l.b16 %v1178
        %v1211 = vunpack.c.l.b16 %v1179
        %v1212 = vunpack.c.l.b16 %v1180
        %v1213 = vunpack.c.l.b16 %v1181
        %v1214 = vunpack.c.l.b16 %v1182
        %v1215 = vpack.c.b16 %v1200, %v1199
        %v1216 = vpack.c.b16 %v1202, %v1201
        %v1217 = vpack.c.b16 %v1204, %v1203
        %v1218 = vpack.c.b16 %v1206, %v1205
        %v1219 = vpack.c.b16 %v1208, %v1207
        %v1220 = vpack.c.b16 %v1210, %v1209
        %v1221 = vpack.c.b16 %v1212, %v1211
        %v1222 = vpack.c.b16 %v1214, %v1213
        %1231 = vmatpush.bf16.msra.mxu0 %v1222
        %1232 = vmatpush.bf16.msra.mxu0 %v1221
        %1233 = vmatpush.bf16.msra.mxu0 %v1220
        %1234 = vmatpush.bf16.msra.mxu0 %v1219
        %1235 = vmatpush.bf16.msra.mxu0 %v1218
        %1236 = vmatpush.bf16.msra.mxu0 %v1217
        %1237 = vmatpush.bf16.msra.mxu0 %v1216
        %1238 = vmatpush.bf16.msra.mxu0 %v1215
        %1239 = vmatmul.bf16.gmra.mxu0 %v1166
        %v1240 = vpop.f32.mrf.mxu0
        %v1241 = vadd.f32 0.0, %v1240
        %v1242 = vpop.f32.mrf.mxu0
        %v1243 = vadd.f32 0.0, %v1242
        %1244 = vdwg.mxu0
        %v1245 = vadd.f32 %v1164, %v1241
        %v1246 = vadd.f32 %v1165, %v1243
        %1247 = vst.msk [vmem:[#allocation4] sm:$0xff] %vm1128, %v1245
        %1248 = vst.msk [vmem:[#allocation4 + $0x8] sm:$0xff] %vm1128, %v1246
        %p1249 = scmp.eq.s32.totalorder %s20, 1
        // Predicated region
        $region98: #{tpu_custom_call.1} parent=88 // pred_check
          %p1250 = pneg %p1249
        $region99: #{tpu_custom_call.1} parent=88 // pred_check_branch
          %1252 = sbr.rel (%p1250) target = $region101
        $region100: #{tpu_custom_call.1} parent=88 // pred_region
          %v1253 = vld [vmem:[%s5 + $0x5] sm:$0x1]
          %v1254 = vld [vmem:[#allocation4] sm:$0xff]
          %v1255 = vld [vmem:[#allocation4 + $0x8] sm:$0xff]
          %v1256 = vperm.slane %v1253, 0
          %v1257 = vadd.f32 %v1254, %v1256
          %v1258 = vadd.f32 %v1255, %v1256
          %v1259 = vld [vmem:[#allocation2] sm:$0xff]
          %v1260 = vld [vmem:[#allocation2 + $0x8] sm:$0xff]
          %v1261 = vadd.f32 %v1257, %v1259
          %v1262 = vadd.f32 %v1258, %v1260
          %1263 = vst.msk [vmem:[#allocation6] sm:$0xff] %vm1128, %v1261
          %1264 = vst.msk [vmem:[#allocation6 + $0x8] sm:$0xff] %vm1128, %v1262
        $region101: #{tpu_custom_call.1} parent=88 // pred_fallthru
          _
        // Predicated region
        $region102: #{tpu_custom_call.1} parent=88 // pred_check
          %p1265 = pneg %p216
        $region103: #{tpu_custom_call.1} parent=88 // pred_check_branch
          %1267 = sbr.rel (%p1265) target = $region105
        $region104: #{tpu_custom_call.1} parent=88 // pred_region
          %1269 = vsyncadd [#allocation7], 0
          %s1270 = sshll.u32 [#allocation6], 4
          %s1271 = int_to_ptr.vmem [resolvable:$true] %s1270
          %s1272 = sshll.u32 %s8, 4
          %s1273 = int_to_ptr.hbm [resolvable:$true] %s1272
          %1278 = dma.vmem_to_hbm [thread:$0]  %s1271, 256, %s1273, [#allocation7], 128, 128, 8
        $region105: #{tpu_custom_call.1} parent=88 // pred_fallthru
          _
        // Predicated region
        $region106: #{tpu_custom_call.1} parent=88 // pred_check
          %p1279 = pneg %p216
        $region107: #{tpu_custom_call.1} parent=88 // pred_check_branch
          %1281 = sbr.rel (%p1279) target = $region109
        $region108: #{tpu_custom_call.1} parent=88 // pred_region
          %1283 = dma.done [#allocation7], 256
        $region109: #{tpu_custom_call.1} parent=88 // pred_fallthru
          _
      $region89: #{tpu_custom_call.1} parent=5 // pred_fallthru
        _
      %p1284 = scmp.le.s32.totalorder 2, %s15
      // Predicated region
      $region110: #{tpu_custom_call.1} parent=5 // pred_check
        %p1285 = pneg %p1284
      $region111: #{tpu_custom_call.1} parent=5 // pred_check_branch
        %1287 = sbr.rel (%p1285) target = $region113
      $region112: #{tpu_custom_call.1} parent=5 // pred_region
        %s1288 = ssub.s32 %s15, 2
      $region113: #{tpu_custom_call.1} parent=5 // pred_fallthru
        _
    $region6: #{tpu_custom_call.1} parent=1 // loop_footer
      %s19 = sadd.s32 1, %s15
    $region7: #{tpu_custom_call.1} parent=1 // loop_footer_branch
      %14 = sbr.rel target = $region3
    $region8: #{tpu_custom_call.1} parent=1 // loop_exit
      _
    %1289 = vsyncpa [#allocation7], 1
    %s1290 = scalar_lea.sflag [#allocation7], 1
    %1291 = vsyncpa %s1290, 1

</llo_original>
